<compile_context>
chip_gen: v7x
topology: tpu7x:2x2x1
jax: 0.10.0
libtpu: 0.0.40
codegen_flags: <defaults>
</compile_context>

<pallas_src>
import jax
import jax.numpy as jnp
from jax.experimental import pallas as pl
from jax.experimental.pallas import tpu as pltpu

EMBED = 50
LAYER = 400
LATENT = 5
FEAT_INFO = [("time", "categ", 745),
             ("pulocation", "categ", 266),
             ("dozone", "categ", 7),
             ("cnt", "real", 1)]
SIZE_INPUT = 3 * EMBED + 1          # 151

# ---- lane-aligned layout of the fused (400 -> OUT_W) decoder-head matmul ----
#   [   0,  768)  'time'        745 real cols + 23  pad (bias -1e30)
#   [ 768, 1152)  'pulocation'  266 real cols + 118 pad (bias -1e30)
#   [1152, 1280)  'dozone'        7 real cols + 121 pad (bias -1e30)
#   [1280, 1408)  tail: cols 1280..1289 carry mu||logvar (added in-kernel from
#                 the encoder matmul), col 1290 is the 'cnt' real head, rest 0.
HEAD_SEGS = ((0, 768, 745), (768, 384, 266), (1152, 128, 7))   # (start, width, real)
TAIL_START = 1280
CNT_COL = 1290
OUT_W = 1408                        # 11 * 128 -> single lane-dense f32 output
NEG_PAD = -1e30                     # finite pad bias (not -inf: avoids inf-inf NaN)


def _round_up(a, m):
    return (a + m - 1) // m * m


# --------------------------- Pallas kernel ---------------------------------

def vae_kernel(x_ref,
               w1_ref, b1_ref,      # fc1                (151,400) bf16 / (1,400)  f32
               wml_ref, bml_ref,    # fc21||fc22 padded  (400,128) bf16 / (1,128)  f32
               w3_ref, b3_ref,      # fc3                (5,400)   bf16 / (1,400)  f32
               wh_ref, bh_ref,      # fused heads        (400,1408)bf16 / (1,1408) f32
               out_ref):            # out: (TILE_N, 1408) f32
    x = x_ref[...].astype(jnp.bfloat16)                                # (TN,151)

    # ---------------- encoder ----------------
    h1 = jnp.maximum(
        jnp.dot(x, w1_ref[...], preferred_element_type=jnp.float32) + b1_ref[...],
        0.0)                                                           # (TN,400)
    mulv = jnp.dot(h1.astype(jnp.bfloat16), wml_ref[...],
                   preferred_element_type=jnp.float32) + bml_ref[...]  # (TN,128)
    # cols 0..4 = mu, 5..9 = logvar, 10..127 = 0

    # ------------- reparameterize (eval mode: z = mu) -------------
    # TODO(synk): training-mode path (eps * exp(0.5*logvar) + mu) needs an eps
    # input; only the deterministic self.training==False branch is implemented.
    z = mulv[:, :LATENT].astype(jnp.bfloat16)                          # (TN,5)

    # ---------------- decoder ----------------
    h3 = jnp.maximum(
        jnp.dot(z, w3_ref[...], preferred_element_type=jnp.float32) + b3_ref[...],
        0.0)                                                           # (TN,400)
    logits = jnp.dot(h3.astype(jnp.bfloat16), wh_ref[...],
                     preferred_element_type=jnp.float32) + bh_ref[...] # (TN,1408)

    # Per-head log-softmax on lane-aligned static slices.  Pad columns carry a
    # -1e30 bias (zero weights) so exp underflows to 0 and they perturb neither
    # the max nor the sum; their (finite, huge-negative) outputs are discarded
    # by the wrapper.
    for start, width, _ in HEAD_SEGS:
        seg = logits[:, start:start + width]
        m = jnp.max(seg, axis=1, keepdims=True)
        shifted = seg - m
        s = jnp.sum(jnp.exp(shifted), axis=1, keepdims=True)
        out_ref[:, start:start + width] = shifted - jnp.log(s)

    # Tail 128-lane block: mu||logvar (cols 0..9 of mulv) + 'cnt' pass-through
    # head (local col 10 of the logits tail); remaining lanes are zero.
    out_ref[:, TAIL_START:OUT_W] = logits[:, TAIL_START:OUT_W] + mulv


# ---------------- parameter init (deterministic, synthetic) ----------------

def _linear_init(key, fan_in, fan_out):
    # PyTorch nn.Linear default: U(-1/sqrt(fan_in), 1/sqrt(fan_in))
    kw, kb = jax.random.split(key)
    bound = 1.0 / jnp.sqrt(jnp.float32(fan_in))
    w = jax.random.uniform(kw, (fan_in, fan_out), jnp.float32, -bound, bound)
    b = jax.random.uniform(kb, (1, fan_out), jnp.float32, -bound, bound)
    return w, b


def init_params(key):
    keys = jax.random.split(key, 12)
    params = {}
    # embeddings: nn.Embedding default N(0,1); max_norm renorm applied at lookup
    emb = []
    for i, (_, col_type, c_size) in enumerate(f for f in FEAT_INFO if f[1] == "categ"):
        emb.append(jax.random.normal(keys[i], (c_size, EMBED), jnp.float32))
    params["embeddings"] = emb
    params["w1"], params["b1"] = _linear_init(keys[3], SIZE_INPUT, LAYER)
    params["w21"], params["b21"] = _linear_init(keys[4], LAYER, LATENT)
    params["w22"], params["b22"] = _linear_init(keys[5], LAYER, LATENT)
    params["w3"], params["b3"] = _linear_init(keys[6], LATENT, LAYER)
    params["wt"], params["bt"] = _linear_init(keys[7], LAYER, 745)
    params["wp"], params["bp"] = _linear_init(keys[8], LAYER, 266)
    params["wd"], params["bd"] = _linear_init(keys[9], LAYER, 7)
    params["wc"], params["bc"] = _linear_init(keys[10], LAYER, 1)
    params["logvar_x"] = jnp.zeros((1, 1), jnp.float32)
    return params


# ---------------- glue: get_inputs (embedding gather + renorm) ----------------
# TODO(synk): PyTorch nn.Embedding(max_norm=1) renormalizes the *stored* rows
# in-place at lookup; here only the returned rows are scaled (same eval output).
# TODO(synk): this gather could be fused into the kernel (tables as constant
# VMEM blocks + int32 index block) to drop the (N,151) HBM round trip; kept in
# XLA because in-kernel dynamic sublane gather lowering is fragile.

def get_inputs(x_data, params):
    parts = []
    e_idx = 0
    for f_idx, (_, col_type, _) in enumerate(FEAT_INFO):
        if col_type == "categ":
            idx = x_data[:, f_idx].astype(jnp.int32)
            rows = jnp.take(params["embeddings"][e_idx], idx, axis=0)
            norm = jnp.sqrt(jnp.sum(rows * rows, axis=1, keepdims=True))
            scale = jnp.where(norm > 1.0, 1.0 / (norm + 1e-7), 1.0)
            parts.append(rows * scale)
            e_idx += 1
        else:  # 'real'
            parts.append(x_data[:, f_idx:f_idx + 1].astype(jnp.float32))
    return jnp.concatenate(parts, axis=1)  # (N, 151)


# ---------------- weight packing (once per call, outside the kernel) ----------

def _pack_params(params):
    w1 = params["w1"].astype(jnp.bfloat16)
    b1 = params["b1"]

    # fc21||fc22 padded to 128 lanes (mu at 0..4, logvar at 5..9, rest 0)
    wml = jnp.zeros((LAYER, 128), jnp.float32)
    wml = wml.at[:, 0:LATENT].set(params["w21"])
    wml = wml.at[:, LATENT:2 * LATENT].set(params["w22"])
    bml = jnp.zeros((1, 128), jnp.float32)
    bml = bml.at[:, 0:LATENT].set(params["b21"])
    bml = bml.at[:, LATENT:2 * LATENT].set(params["b22"])

    w3 = params["w3"].astype(jnp.bfloat16)
    b3 = params["b3"]

    # fused decoder heads, each categorical head in its own lane-aligned segment
    wh = jnp.zeros((LAYER, OUT_W), jnp.float32)
    bh = jnp.full((1, OUT_W), NEG_PAD, jnp.float32)
    for (start, _, size), w_key, b_key in zip(HEAD_SEGS,
                                              ("wt", "wp", "wd"),
                                              ("bt", "bp", "bd")):
        wh = wh.at[:, start:start + size].set(params[w_key])
        bh = bh.at[:, start:start + size].set(params[b_key])
    bh = bh.at[:, TAIL_START:OUT_W].set(0.0)          # tail pads pass through as 0
    wh = wh.at[:, CNT_COL:CNT_COL + 1].set(params["wc"])
    bh = bh.at[:, CNT_COL:CNT_COL + 1].set(params["bc"])

    return (w1, b1, wml.astype(jnp.bfloat16), bml, w3, b3,
            wh.astype(jnp.bfloat16), bh)


# ---------------- wrapper: forward via pallas_call ----------------

def vae_forward(x_data, params):
    x_in = get_inputs(x_data, params)                 # (N, 151) f32
    n = x_in.shape[0]

    # Batch tiling: big tiles amortize the ~0.35us per-step overhead; >=2 grid
    # steps whenever possible so ("parallel",) can use both v7x TensorCores;
    # capped at 1024 rows so the double-buffered f32 (tile_n,1408) output slab
    # stays well inside v7x's 64 MiB VMEM (v5e/v6e could take 2048 at a larger
    # vmem_limit_bytes).
    if n <= 8:
        tile_n = _round_up(n, 8)
    else:
        tile_n = min(1024, _round_up((n + 1) // 2, 8))
    n_pad = _round_up(n, tile_n)
    if n_pad != n:
        x_in = jnp.pad(x_in, ((0, n_pad - n), (0, 0)))
    grid = (n_pad // tile_n,)

    w1, b1, wml, bml, w3, b3, wh, bh = _pack_params(params)

    def row_spec(feat):
        return pl.BlockSpec((tile_n, feat), lambda i: (i, 0))

    def const_spec(r, c):
        # TODO(synk): pipeline_mode=pl.Buffered(1) here would reclaim ~1 MiB on
        # v7x (constant index_map => second pipeline buffer is wasted) if tile_n
        # is ever pushed toward the VMEM ceiling; omitted to keep lowering simple.
        return pl.BlockSpec((r, c), lambda i: (0, 0))

    in_specs = [
        row_spec(SIZE_INPUT),                 # x
        const_spec(SIZE_INPUT, LAYER),        # w1
        const_spec(1, LAYER),                 # b1
        const_spec(LAYER, 128),               # wml (fc21||fc22, padded)
        const_spec(1, 128),                   # bml
        const_spec(LATENT, LAYER),            # w3
        const_spec(1, LAYER),                 # b3
        const_spec(LAYER, OUT_W),             # wh (fused heads)
        const_spec(1, OUT_W),                 # bh
    ]
    out_spec = row_spec(OUT_W)
    out_shape = jax.ShapeDtypeStruct((n_pad, OUT_W), jnp.float32)

    mm_flops = 2 * n_pad * (SIZE_INPUT * LAYER + LAYER * 128
                            + LATENT * LAYER + LAYER * OUT_W)
    weight_bytes = (2 * (SIZE_INPUT * LAYER + LAYER * 128
                         + LATENT * LAYER + LAYER * OUT_W)
                    + 4 * (LAYER + 128 + LAYER + OUT_W))
    io_bytes = n_pad * 4 * (SIZE_INPUT + OUT_W)
    cost = pl.CostEstimate(flops=mm_flops,
                           transcendentals=n_pad * (768 + 384 + 128 + 3),
                           bytes_accessed=weight_bytes + io_bytes)

    out = pl.pallas_call(
        vae_kernel,
        grid=grid,
        in_specs=in_specs,
        out_specs=out_spec,
        out_shape=out_shape,
        compiler_params=pltpu.CompilerParams(
            dimension_semantics=("parallel",),
            vmem_limit_bytes=48 * 1024 * 1024),
        cost_estimate=cost,
    )(x_in, w1, b1, wml, bml, w3, b3, wh, bh)

    out = out[:n]
    x_rec = jnp.concatenate(
        [out[:, s:s + size] for s, _, size in HEAD_SEGS]
        + [out[:, CNT_COL:CNT_COL + 1]], axis=1)                 # (N, 1019)
    mu = out[:, TAIL_START:TAIL_START + LATENT]
    logvar = out[:, TAIL_START + LATENT:TAIL_START + 2 * LATENT]

    p_params = {
        "x": x_rec,
        "logvar_x": jnp.clip(params["logvar_x"], -3.0, 3.0),    # (1, 1)
    }
    q_params = {"z": {"mu": mu, "logvar": logvar}}
    q_samples = {"z": mu}                                        # eval mode: z = mu
    return p_params, q_params, q_samples


# ---------------- pure-JAX reference (mirrors the bf16 matmul casts) ----------

def vae_forward_ref(x_data, params):
    x_in = get_inputs(x_data, params)
    xb = x_in.astype(jnp.bfloat16)
    h1 = jnp.maximum(jnp.dot(xb, params["w1"].astype(jnp.bfloat16),
                             preferred_element_type=jnp.float32) + params["b1"], 0.0)
    h1b = h1.astype(jnp.bfloat16)
    mu = jnp.dot(h1b, params["w21"].astype(jnp.bfloat16),
                 preferred_element_type=jnp.float32) + params["b21"]
    logvar = jnp.dot(h1b, params["w22"].astype(jnp.bfloat16),
                     preferred_element_type=jnp.float32) + params["b22"]
    z = mu.astype(jnp.bfloat16)
    h3 = jnp.maximum(jnp.dot(z, params["w3"].astype(jnp.bfloat16),
                             preferred_element_type=jnp.float32) + params["b3"], 0.0)
    h3b = h3.astype(jnp.bfloat16)
    outs = []
    for w_key, b_key, is_categ in (("wt", "bt", True), ("wp", "bp", True),
                                   ("wd", "bd", True), ("wc", "bc", False)):
        logit = jnp.dot(h3b, params[w_key].astype(jnp.bfloat16),
                        preferred_element_type=jnp.float32) + params[b_key]
        outs.append(jax.nn.log_softmax(logit, axis=1) if is_categ else logit)
    return jnp.concatenate(outs, axis=1), mu, logvar


if __name__ == "__main__":
    key = jax.random.PRNGKey(0)
    k_params, k_t, k_p, k_d, k_c = jax.random.split(key, 5)
    params = init_params(k_params)

    N = 8
    t_idx = jax.random.randint(k_t, (N,), 0, 745)
    p_idx = jax.random.randint(k_p, (N,), 0, 266)
    d_idx = jax.random.randint(k_d, (N,), 0, 7)
    cnt = jax.random.normal(k_c, (N,), jnp.float32)
    # x_data mirrors the PyTorch input: (N, 4) with integer-valued categ cols
    x_data = jnp.stack([t_idx.astype(jnp.float32),
                        p_idx.astype(jnp.float32),
                        d_idx.astype(jnp.float32),
                        cnt], axis=1)

    p_params, q_params, q_samples = vae_forward(x_data, params)
    jax.block_until_ready((p_params, q_params, q_samples))

    # shape checks
    assert p_params["x"].shape == (N, 745 + 266 + 7 + 1)
    assert q_params["z"]["mu"].shape == (N, LATENT)
    assert q_params["z"]["logvar"].shape == (N, LATENT)
    assert q_samples["z"].shape == (N, LATENT)
    assert p_params["logvar_x"].shape == (1, 1)

    # numerical sanity: each categorical head's probabilities sum to ~1
    start = 0
    for _, _, size in HEAD_SEGS:
        probs = jnp.exp(p_params["x"][:, start:start + size]).sum(axis=1)
        assert bool(jnp.all(jnp.abs(probs - 1.0) < 1e-2)), "softmax normalization"
        start += size

    # compare against the plain-JAX reference (same bf16 casts; loose tolerance)
    x_ref_out, mu_ref, lv_ref = vae_forward_ref(x_data, params)
    assert bool(jnp.max(jnp.abs(p_params["x"] - x_ref_out)) < 5e-2), "x mismatch"
    assert bool(jnp.max(jnp.abs(q_params["z"]["mu"] - mu_ref)) < 5e-2), "mu mismatch"
    assert bool(jnp.max(jnp.abs(q_params["z"]["logvar"] - lv_ref)) < 5e-2), "logvar mismatch"

    print("KERNEL_OK")
</pallas_src>

<mosaic_0001>
module attributes {stable_mosaic.version = 11 : i64} {
  func.func @vae_kernel(%arg0: i32, %arg1: memref<8x151xf32, #tpu.memory_space<vmem>>, %arg2: memref<151x400xbf16, #tpu.memory_space<vmem>>, %arg3: memref<1x400xf32, #tpu.memory_space<vmem>>, %arg4: memref<400x128xbf16, #tpu.memory_space<vmem>>, %arg5: memref<1x128xf32, #tpu.memory_space<vmem>>, %arg6: memref<5x400xbf16, #tpu.memory_space<vmem>>, %arg7: memref<1x400xf32, #tpu.memory_space<vmem>>, %arg8: memref<400x1408xbf16, #tpu.memory_space<vmem>>, %arg9: memref<1x1408xf32, #tpu.memory_space<vmem>>, %arg10: memref<8x1408xf32, #tpu.memory_space<vmem>>) attributes {dimension_semantics = [#tpu.dimension_semantics<parallel>], iteration_bounds = array<i64: 1>, scalar_prefetch = 0 : i64, scratch_operands = 0 : i64, tpu.core_type = #tpu.core_type<tc>, window_params = [{transform_indices = @transform_0, window_bounds = array<i64: 8, 151>}, {pipeline_mode = #tpu.pipeline_mode<synchronous>, transform_indices = @transform_1, window_bounds = array<i64: 151, 400>}, {pipeline_mode = #tpu.pipeline_mode<synchronous>, transform_indices = @transform_2, window_bounds = array<i64: 1, 400>}, {pipeline_mode = #tpu.pipeline_mode<synchronous>, transform_indices = @transform_3, window_bounds = array<i64: 400, 128>}, {pipeline_mode = #tpu.pipeline_mode<synchronous>, transform_indices = @transform_4, window_bounds = array<i64: 1, 128>}, {pipeline_mode = #tpu.pipeline_mode<synchronous>, transform_indices = @transform_5, window_bounds = array<i64: 5, 400>}, {pipeline_mode = #tpu.pipeline_mode<synchronous>, transform_indices = @transform_6, window_bounds = array<i64: 1, 400>}, {pipeline_mode = #tpu.pipeline_mode<synchronous>, transform_indices = @transform_7, window_bounds = array<i64: 400, 1408>}, {pipeline_mode = #tpu.pipeline_mode<synchronous>, transform_indices = @transform_8, window_bounds = array<i64: 1, 1408>}, {transform_indices = @transform_9, window_bounds = array<i64: 8, 1408>}]} {
    %c0 = arith.constant 0 : index
    %c0_0 = arith.constant 0 : index
    %0 = vector.load %arg1[%c0, %c0_0] : memref<8x151xf32, #tpu.memory_space<vmem>>, vector<8x151xf32>
    %1 = arith.truncf %0 : vector<8x151xf32> to vector<8x151xbf16>
    %c0_1 = arith.constant 0 : index
    %c0_2 = arith.constant 0 : index
    %2 = vector.load %arg2[%c0_1, %c0_2] : memref<151x400xbf16, #tpu.memory_space<vmem>>, vector<151x400xbf16>
    %cst = arith.constant dense<0.000000e+00> : vector<8x400xf32>
    %3 = tpu.matmul %1, %2, %cst {dimension_numbers = #tpu.dot_dimension_numbers<[1], [0], [0], [1], [0, 0, 1, 1], [], []>} : vector<8x151xbf16>, vector<151x400xbf16>, vector<8x400xf32> -> vector<8x400xf32>
    %c0_3 = arith.constant 0 : index
    %c0_4 = arith.constant 0 : index
    %4 = vector.load %arg3[%c0_3, %c0_4] : memref<1x400xf32, #tpu.memory_space<vmem>>, vector<1x400xf32>
    %5 = vector.broadcast %4 : vector<1x400xf32> to vector<8x400xf32>
    %6 = arith.addf %3, %5 : vector<8x400xf32>
    %cst_5 = arith.constant 0.000000e+00 : f32
    %7 = vector.broadcast %cst_5 : f32 to vector<8x400xf32>
    %8 = arith.maximumf %6, %7 : vector<8x400xf32>
    %9 = arith.truncf %8 : vector<8x400xf32> to vector<8x400xbf16>
    %c0_6 = arith.constant 0 : index
    %c0_7 = arith.constant 0 : index
    %10 = vector.load %arg4[%c0_6, %c0_7] : memref<400x128xbf16, #tpu.memory_space<vmem>>, vector<400x128xbf16>
    %cst_8 = arith.constant dense<0.000000e+00> : vector<8x128xf32>
    %11 = tpu.matmul %9, %10, %cst_8 {dimension_numbers = #tpu.dot_dimension_numbers<[1], [0], [0], [1], [0, 0, 1, 1], [], []>} : vector<8x400xbf16>, vector<400x128xbf16>, vector<8x128xf32> -> vector<8x128xf32>
    %c0_9 = arith.constant 0 : index
    %c0_10 = arith.constant 0 : index
    %12 = vector.load %arg5[%c0_9, %c0_10] : memref<1x128xf32, #tpu.memory_space<vmem>>, vector<1x128xf32>
    %13 = vector.broadcast %12 : vector<1x128xf32> to vector<8x128xf32>
    %14 = arith.addf %11, %13 : vector<8x128xf32>
    %15 = vector.extract_strided_slice %14 {offsets = [0, 0], sizes = [8, 5], strides = [1, 1]} : vector<8x128xf32> to vector<8x5xf32>
    %16 = arith.truncf %15 : vector<8x5xf32> to vector<8x5xbf16>
    %c0_11 = arith.constant 0 : index
    %c0_12 = arith.constant 0 : index
    %17 = vector.load %arg6[%c0_11, %c0_12] : memref<5x400xbf16, #tpu.memory_space<vmem>>, vector<5x400xbf16>
    %cst_13 = arith.constant dense<0.000000e+00> : vector<8x400xf32>
    %18 = tpu.matmul %16, %17, %cst_13 {dimension_numbers = #tpu.dot_dimension_numbers<[1], [0], [0], [1], [0, 0, 1, 1], [], []>} : vector<8x5xbf16>, vector<5x400xbf16>, vector<8x400xf32> -> vector<8x400xf32>
    %c0_14 = arith.constant 0 : index
    %c0_15 = arith.constant 0 : index
    %19 = vector.load %arg7[%c0_14, %c0_15] : memref<1x400xf32, #tpu.memory_space<vmem>>, vector<1x400xf32>
    %20 = vector.broadcast %19 : vector<1x400xf32> to vector<8x400xf32>
    %21 = arith.addf %18, %20 : vector<8x400xf32>
    %cst_16 = arith.constant 0.000000e+00 : f32
    %22 = vector.broadcast %cst_16 : f32 to vector<8x400xf32>
    %23 = arith.maximumf %21, %22 : vector<8x400xf32>
    %24 = arith.truncf %23 : vector<8x400xf32> to vector<8x400xbf16>
    %c0_17 = arith.constant 0 : index
    %c0_18 = arith.constant 0 : index
    %25 = vector.load %arg8[%c0_17, %c0_18] : memref<400x1408xbf16, #tpu.memory_space<vmem>>, vector<400x1408xbf16>
    %cst_19 = arith.constant dense<0.000000e+00> : vector<8x1408xf32>
    %26 = tpu.matmul %24, %25, %cst_19 {dimension_numbers = #tpu.dot_dimension_numbers<[1], [0], [0], [1], [0, 0, 1, 1], [], []>} : vector<8x400xbf16>, vector<400x1408xbf16>, vector<8x1408xf32> -> vector<8x1408xf32>
    %c0_20 = arith.constant 0 : index
    %c0_21 = arith.constant 0 : index
    %27 = vector.load %arg9[%c0_20, %c0_21] : memref<1x1408xf32, #tpu.memory_space<vmem>>, vector<1x1408xf32>
    %28 = vector.broadcast %27 : vector<1x1408xf32> to vector<8x1408xf32>
    %29 = arith.addf %26, %28 : vector<8x1408xf32>
    %30 = vector.extract_strided_slice %29 {offsets = [0, 0], sizes = [8, 768], strides = [1, 1]} : vector<8x1408xf32> to vector<8x768xf32>
    %cst_22 = arith.constant dense<0xFF800000> : vector<8xf32>
    %31 = vector.multi_reduction <maximumf>, %30, %cst_22 [1] : vector<8x768xf32> to vector<8xf32>
    %32 = vector.shape_cast %31 : vector<8xf32> to vector<8x1xf32>
    %33 = vector.broadcast %32 : vector<8x1xf32> to vector<8x768xf32>
    %34 = arith.subf %30, %33 : vector<8x768xf32>
    %35 = math.exp %34 : vector<8x768xf32>
    %cst_23 = arith.constant dense<0.000000e+00> : vector<8xf32>
    %36 = vector.multi_reduction <add>, %35, %cst_23 [1] : vector<8x768xf32> to vector<8xf32>
    %37 = vector.shape_cast %36 : vector<8xf32> to vector<8x1xf32>
    %38 = math.log %37 : vector<8x1xf32>
    %39 = vector.broadcast %38 : vector<8x1xf32> to vector<8x768xf32>
    %40 = arith.subf %34, %39 : vector<8x768xf32>
    %c0_24 = arith.constant 0 : index
    %c0_25 = arith.constant 0 : index
    %41 = vector.load %arg10[%c0_24, %c0_25] : memref<8x1408xf32, #tpu.memory_space<vmem>>, vector<8x768xf32>
    tpu.vector_store %arg10[%c0_24, %c0_25], %40 {strides = array<i32>} : memref<8x1408xf32, #tpu.memory_space<vmem>>, vector<8x768xf32>,
    %42 = vector.extract_strided_slice %29 {offsets = [0, 768], sizes = [8, 384], strides = [1, 1]} : vector<8x1408xf32> to vector<8x384xf32>
    %cst_26 = arith.constant dense<0xFF800000> : vector<8xf32>
    %43 = vector.multi_reduction <maximumf>, %42, %cst_26 [1] : vector<8x384xf32> to vector<8xf32>
    %44 = vector.shape_cast %43 : vector<8xf32> to vector<8x1xf32>
    %45 = vector.broadcast %44 : vector<8x1xf32> to vector<8x384xf32>
    %46 = arith.subf %42, %45 : vector<8x384xf32>
    %47 = math.exp %46 : vector<8x384xf32>
    %cst_27 = arith.constant dense<0.000000e+00> : vector<8xf32>
    %48 = vector.multi_reduction <add>, %47, %cst_27 [1] : vector<8x384xf32> to vector<8xf32>
    %49 = vector.shape_cast %48 : vector<8xf32> to vector<8x1xf32>
    %50 = math.log %49 : vector<8x1xf32>
    %51 = vector.broadcast %50 : vector<8x1xf32> to vector<8x384xf32>
    %52 = arith.subf %46, %51 : vector<8x384xf32>
    %c0_28 = arith.constant 0 : index
    %c768 = arith.constant 768 : index
    %53 = vector.load %arg10[%c0_28, %c768] : memref<8x1408xf32, #tpu.memory_space<vmem>>, vector<8x384xf32>
    tpu.vector_store %arg10[%c0_28, %c768], %52 {strides = array<i32>} : memref<8x1408xf32, #tpu.memory_space<vmem>>, vector<8x384xf32>,
    %54 = vector.extract_strided_slice %29 {offsets = [0, 1152], sizes = [8, 128], strides = [1, 1]} : vector<8x1408xf32> to vector<8x128xf32>
    %cst_29 = arith.constant dense<0xFF800000> : vector<8xf32>
    %55 = vector.multi_reduction <maximumf>, %54, %cst_29 [1] : vector<8x128xf32> to vector<8xf32>
    %56 = vector.shape_cast %55 : vector<8xf32> to vector<8x1xf32>
    %57 = vector.broadcast %56 : vector<8x1xf32> to vector<8x128xf32>
    %58 = arith.subf %54, %57 : vector<8x128xf32>
    %59 = math.exp %58 : vector<8x128xf32>
    %cst_30 = arith.constant dense<0.000000e+00> : vector<8xf32>
    %60 = vector.multi_reduction <add>, %59, %cst_30 [1] : vector<8x128xf32> to vector<8xf32>
    %61 = vector.shape_cast %60 : vector<8xf32> to vector<8x1xf32>
    %62 = math.log %61 : vector<8x1xf32>
    %63 = vector.broadcast %62 : vector<8x1xf32> to vector<8x128xf32>
    %64 = arith.subf %58, %63 : vector<8x128xf32>
    %c0_31 = arith.constant 0 : index
    %c1152 = arith.constant 1152 : index
    %65 = vector.load %arg10[%c0_31, %c1152] : memref<8x1408xf32, #tpu.memory_space<vmem>>, vector<8x128xf32>
    tpu.vector_store %arg10[%c0_31, %c1152], %64 {strides = array<i32>} : memref<8x1408xf32, #tpu.memory_space<vmem>>, vector<8x128xf32>,
    %66 = vector.extract_strided_slice %29 {offsets = [0, 1280], sizes = [8, 128], strides = [1, 1]} : vector<8x1408xf32> to vector<8x128xf32>
    %67 = arith.addf %66, %14 : vector<8x128xf32>
    %c0_32 = arith.constant 0 : index
    %c1280 = arith.constant 1280 : index
    %68 = vector.load %arg10[%c0_32, %c1280] : memref<8x1408xf32, #tpu.memory_space<vmem>>, vector<8x128xf32>
    tpu.vector_store %arg10[%c0_32, %c1280], %67 {strides = array<i32>} : memref<8x1408xf32, #tpu.memory_space<vmem>>, vector<8x128xf32>,
    return
  }
  func.func @transform_0(%arg0: i32) -> (i32, i32) {
    %c0_i32 = arith.constant 0 : i32
    %c0_i32_0 = arith.constant 0 : i32
    return %arg0, %c0_i32 : i32, i32
  }
  func.func @transform_1(%arg0: i32) -> (i32, i32) {
    %c0_i32 = arith.constant 0 : i32
    %c0_i32_0 = arith.constant 0 : i32
    %c0_i32_1 = arith.constant 0 : i32
    return %c0_i32, %c0_i32_0 : i32, i32
  }
  func.func @transform_2(%arg0: i32) -> (i32, i32) {
    %c0_i32 = arith.constant 0 : i32
    %c0_i32_0 = arith.constant 0 : i32
    %c0_i32_1 = arith.constant 0 : i32
    return %c0_i32, %c0_i32_0 : i32, i32
  }
  func.func @transform_3(%arg0: i32) -> (i32, i32) {
    %c0_i32 = arith.constant 0 : i32
    %c0_i32_0 = arith.constant 0 : i32
    %c0_i32_1 = arith.constant 0 : i32
    return %c0_i32, %c0_i32_0 : i32, i32
  }
  func.func @transform_4(%arg0: i32) -> (i32, i32) {
    %c0_i32 = arith.constant 0 : i32
    %c0_i32_0 = arith.constant 0 : i32
    %c0_i32_1 = arith.constant 0 : i32
    return %c0_i32, %c0_i32_0 : i32, i32
  }
  func.func @transform_5(%arg0: i32) -> (i32, i32) {
    %c0_i32 = arith.constant 0 : i32
    %c0_i32_0 = arith.constant 0 : i32
    %c0_i32_1 = arith.constant 0 : i32
    return %c0_i32, %c0_i32_0 : i32, i32
  }
  func.func @transform_6(%arg0: i32) -> (i32, i32) {
    %c0_i32 = arith.constant 0 : i32
    %c0_i32_0 = arith.constant 0 : i32
    %c0_i32_1 = arith.constant 0 : i32
    return %c0_i32, %c0_i32_0 : i32, i32
  }
  func.func @transform_7(%arg0: i32) -> (i32, i32) {
    %c0_i32 = arith.constant 0 : i32
    %c0_i32_0 = arith.constant 0 : i32
    %c0_i32_1 = arith.constant 0 : i32
    return %c0_i32, %c0_i32_0 : i32, i32
  }
  func.func @transform_8(%arg0: i32) -> (i32, i32) {
    %c0_i32 = arith.constant 0 : i32
    %c0_i32_0 = arith.constant 0 : i32
    %c0_i32_1 = arith.constant 0 : i32
    return %c0_i32, %c0_i32_0 : i32, i32
  }
  func.func @transform_9(%arg0: i32) -> (i32, i32) {
    %c0_i32 = arith.constant 0 : i32
    %c0_i32_0 = arith.constant 0 : i32
    return %arg0, %c0_i32 : i32, i32
  }
}

</mosaic_0001>

<llo_original>
// kernel: tpu_custom_call.1
$region0: #{tpu_custom_call.1}
  #allocation0 [shape = 'u32[]', space=smem, size = 0x4, offset = 0x4, fixed_abs, tag = 'smem constant byte address 0x4 - core index']
  #allocation1 [shape = 'u32[144,128]{1,0:T(1,128)}', space=vmem, size = 0x12000, scoped, tag = 'internal scratch']
  %s0 = inlined_call_operand.hbm [shape: f32[8,151], index: 0, kind: input, shape index: {}]
  %s1 = inlined_call_operand.hbm [shape: bf16[151,400], index: 1, kind: input, shape index: {}]
  %s2 = inlined_call_operand.hbm [shape: f32[1,400], index: 2, kind: input, shape index: {}]
  %s3 = inlined_call_operand.hbm [shape: bf16[400,128], index: 3, kind: input, shape index: {}]
  %s4 = inlined_call_operand.hbm [shape: f32[1,128], index: 4, kind: input, shape index: {}]
  %s5 = inlined_call_operand.hbm [shape: bf16[5,400], index: 5, kind: input, shape index: {}]
  %s6 = inlined_call_operand.hbm [shape: f32[1,400], index: 6, kind: input, shape index: {}]
  %s7 = inlined_call_operand.hbm [shape: bf16[400,1408], index: 7, kind: input, shape index: {}]
  %s8 = inlined_call_operand.hbm [shape: f32[1,1408], index: 8, kind: input, shape index: {}]
  %s9 = inlined_call_operand.hbm [shape: f32[8,1408], index: 9, kind: output, shape index: {}]
  %s10 = sld [smem:[#allocation0]]
  $region82: #{tpu_custom_call.1} parent=0
    _
  %s12 = ssub.s32 1, %s10
  %s13 = scalar_select 0, %s12, %s10
  $region1: #{tpu_custom_call.1} parent=0
    #allocation2 [shape = 'u8[8192]{0}', space=vmem, size = 0x2000, scoped, tag = 'input window, operand 0, single buffered']
    #allocation3 [shape = 's32[1]{0}', space=sflag, size = 0x4, scoped, tag = 'scoped memory for tpu_custom_call.1']
    #allocation4 [shape = 's32[1]{0}', space=sflag, size = 0x4, scoped, tag = 'scoped memory for tpu_custom_call.1']
    #allocation5 [shape = 'u8[155648]{0}', space=vmem, size = 0x26000, scoped, tag = 'input window, operand 1, single buffered']
    #allocation6 [shape = 's32[1]{0}', space=sflag, size = 0x4, scoped, tag = 'scoped memory for tpu_custom_call.1']
    #allocation7 [shape = 'u8[2048]{0}', space=vmem, size = 0x800, scoped, tag = 'input window, operand 2, single buffered']
    #allocation8 [shape = 'u8[102400]{0}', space=vmem, size = 0x19000, scoped, tag = 'input window, operand 3, single buffered']
    #allocation9 [shape = 's32[1]{0}', space=sflag, size = 0x4, scoped, tag = 'scoped memory for tpu_custom_call.1']
    #allocation10 [shape = 'u8[512]{0}', space=vmem, size = 0x400, scoped, tag = 'input window, operand 4, single buffered']
    #allocation11 [shape = 'u8[8192]{0}', space=vmem, size = 0x2000, scoped, tag = 'input window, operand 5, single buffered']
    #allocation12 [shape = 's32[1]{0}', space=sflag, size = 0x4, scoped, tag = 'scoped memory for tpu_custom_call.1']
    #allocation13 [shape = 'u8[2048]{0}', space=vmem, size = 0x800, scoped, tag = 'input window, operand 6, single buffered']
    #allocation14 [shape = 'u8[1126400]{0}', space=vmem, size = 0x113000, scoped, tag = 'input window, operand 7, single buffered']
    #allocation15 [shape = 's32[1]{0}', space=sflag, size = 0x4, scoped, tag = 'scoped memory for tpu_custom_call.1']
    #allocation16 [shape = 'u8[5632]{0}', space=vmem, size = 0x1800, scoped, tag = 'input window, operand 8, single buffered']
    #allocation17 [shape = 'u8[45056]{0}', space=vmem, size = 0xb000, scoped, tag = 'output window, operand 0, single buffered']
    %14 = vsyncpa [#allocation3], 0
    %15 = vsyncpa [#allocation6], 0
    %16 = vsyncpa [#allocation9], 0
    %17 = vsyncpa [#allocation12], 0
    %18 = vsyncpa [#allocation15], 0
    %19 = vsyncpa [#allocation4], 0
    // Predicated region
    $region2: #{tpu_custom_call.1} parent=1 // pred_check
      _
    $region3: #{tpu_custom_call.1} parent=1 // pred_check_branch
      %21 = sbr.rel (0) target = $region5
    $region4: #{tpu_custom_call.1} parent=1 // pred_region
      %s23 = ssub.s32 256, 256
      %24 = vsyncadd [#allocation3], %s23
      %s26 = sshll.u32 [#allocation2], 4
      %s27 = int_to_ptr.vmem [resolvable:$true] %s26
      %29 = dma.hbm_to_vmem [thread:$0]  %s0, 256, %s27, [#allocation3]
    $region5: #{tpu_custom_call.1} parent=1 // pred_fallthru
      _
    // Predicated region
    $region6: #{tpu_custom_call.1} parent=1 // pred_check
      _
    $region7: #{tpu_custom_call.1} parent=1 // pred_check_branch
      %31 = sbr.rel (0) target = $region9
    $region8: #{tpu_custom_call.1} parent=1 // pred_region
      %s33 = ssub.s32 4864, 4864
      %34 = vsyncadd [#allocation6], %s33
      %s35 = sshll.u32 [#allocation5], 4
      %s36 = int_to_ptr.vmem [resolvable:$true] %s35
      %41 = dma.hbm_to_vmem [thread:$0]  %s1, 4864, %s36, [#allocation6], 256, 256, 16
    $region9: #{tpu_custom_call.1} parent=1 // pred_fallthru
      _
    // Predicated region
    $region10: #{tpu_custom_call.1} parent=1 // pred_check
      _
    $region11: #{tpu_custom_call.1} parent=1 // pred_check_branch
      %43 = sbr.rel (0) target = $region13
    $region12: #{tpu_custom_call.1} parent=1 // pred_region
      %s45 = ssub.s32 64, 64
      %46 = vsyncadd [#allocation6], %s45
      %s48 = sshll.u32 [#allocation7], 4
      %s49 = int_to_ptr.vmem [resolvable:$true] %s48
      %51 = dma.hbm_to_vmem [thread:$0]  %s2, 64, %s49, [#allocation6]
    $region13: #{tpu_custom_call.1} parent=1 // pred_fallthru
      _
    // Predicated region
    $region14: #{tpu_custom_call.1} parent=1 // pred_check
      _
    $region15: #{tpu_custom_call.1} parent=1 // pred_check_branch
      %53 = sbr.rel (0) target = $region17
    $region16: #{tpu_custom_call.1} parent=1 // pred_region
      %s55 = ssub.s32 3200, 3200
      %56 = vsyncadd [#allocation9], %s55
      %s57 = sshll.u32 [#allocation8], 4
      %s58 = int_to_ptr.vmem [resolvable:$true] %s57
      %63 = dma.hbm_to_vmem [thread:$0]  %s3, 3200, %s58, [#allocation9], 64, 64, 4
    $region17: #{tpu_custom_call.1} parent=1 // pred_fallthru
      _
    // Predicated region
    $region18: #{tpu_custom_call.1} parent=1 // pred_check
      _
    $region19: #{tpu_custom_call.1} parent=1 // pred_check_branch
      %65 = sbr.rel (0) target = $region21
    $region20: #{tpu_custom_call.1} parent=1 // pred_region
      %s67 = ssub.s32 16, 16
      %68 = vsyncadd [#allocation9], %s67
      %s70 = sshll.u32 [#allocation10], 4
      %s71 = int_to_ptr.vmem [resolvable:$true] %s70
      %73 = dma.hbm_to_vmem [thread:$0]  %s4, 16, %s71, [#allocation9]
    $region21: #{tpu_custom_call.1} parent=1 // pred_fallthru
      _
    // Predicated region
    $region22: #{tpu_custom_call.1} parent=1 // pred_check
      _
    $region23: #{tpu_custom_call.1} parent=1 // pred_check_branch
      %75 = sbr.rel (0) target = $region25
    $region24: #{tpu_custom_call.1} parent=1 // pred_region
      %s77 = ssub.s32 256, 256
      %78 = vsyncadd [#allocation12], %s77
      %s80 = sshll.u32 [#allocation11], 4
      %s81 = int_to_ptr.vmem [resolvable:$true] %s80
      %83 = dma.hbm_to_vmem [thread:$0]  %s5, 256, %s81, [#allocation12]
    $region25: #{tpu_custom_call.1} parent=1 // pred_fallthru
      _
    // Predicated region
    $region26: #{tpu_custom_call.1} parent=1 // pred_check
      _
    $region27: #{tpu_custom_call.1} parent=1 // pred_check_branch
      %85 = sbr.rel (0) target = $region29
    $region28: #{tpu_custom_call.1} parent=1 // pred_region
      %s87 = ssub.s32 64, 64
      %88 = vsyncadd [#allocation12], %s87
      %s90 = sshll.u32 [#allocation13], 4
      %s91 = int_to_ptr.vmem [resolvable:$true] %s90
      %93 = dma.hbm_to_vmem [thread:$0]  %s6, 64, %s91, [#allocation12]
    $region29: #{tpu_custom_call.1} parent=1 // pred_fallthru
      _
    // Predicated region
    $region30: #{tpu_custom_call.1} parent=1 // pred_check
      _
    $region31: #{tpu_custom_call.1} parent=1 // pred_check_branch
      %95 = sbr.rel (0) target = $region33
    $region32: #{tpu_custom_call.1} parent=1 // pred_region
      %s97 = ssub.s32 35200, 35200
      %98 = vsyncadd [#allocation15], %s97
      %s99 = sshll.u32 [#allocation14], 4
      %s100 = int_to_ptr.vmem [resolvable:$true] %s99
      %105 = dma.hbm_to_vmem [thread:$0]  %s7, 35200, %s100, [#allocation15], 704, 704, 44
    $region33: #{tpu_custom_call.1} parent=1 // pred_fallthru
      _
    // Predicated region
    $region34: #{tpu_custom_call.1} parent=1 // pred_check
      _
    $region35: #{tpu_custom_call.1} parent=1 // pred_check_branch
      %107 = sbr.rel (0) target = $region37
    $region36: #{tpu_custom_call.1} parent=1 // pred_region
      %s109 = ssub.s32 176, 176
      %110 = vsyncadd [#allocation15], %s109
      %s112 = sshll.u32 [#allocation16], 4
      %s113 = int_to_ptr.vmem [resolvable:$true] %s112
      %115 = dma.hbm_to_vmem [thread:$0]  %s8, 176, %s113, [#allocation15]
    $region37: #{tpu_custom_call.1} parent=1 // pred_fallthru
      _
    // Predicated region
    $region38: #{tpu_custom_call.1} parent=1 // pred_check
      _
    $region39: #{tpu_custom_call.1} parent=1 // pred_check_branch
      %117 = sbr.rel (0) target = $region41
    $region40: #{tpu_custom_call.1} parent=1 // pred_region
      %118 = dma.done [#allocation3], 256
    $region41: #{tpu_custom_call.1} parent=1 // pred_fallthru
      _
    // Predicated region
    $region42: #{tpu_custom_call.1} parent=1 // pred_check
      _
    $region43: #{tpu_custom_call.1} parent=1 // pred_check_branch
      %120 = sbr.rel (0) target = $region45
    $region44: #{tpu_custom_call.1} parent=1 // pred_region
      %121 = dma.done [#allocation6], 4864
    $region45: #{tpu_custom_call.1} parent=1 // pred_fallthru
      _
    // Predicated region
    $region46: #{tpu_custom_call.1} parent=1 // pred_check
      _
    $region47: #{tpu_custom_call.1} parent=1 // pred_check_branch
      %123 = sbr.rel (0) target = $region49
    $region48: #{tpu_custom_call.1} parent=1 // pred_region
      %124 = dma.done [#allocation6], 64
    $region49: #{tpu_custom_call.1} parent=1 // pred_fallthru
      _
    // Predicated region
    $region50: #{tpu_custom_call.1} parent=1 // pred_check
      _
    $region51: #{tpu_custom_call.1} parent=1 // pred_check_branch
      %126 = sbr.rel (0) target = $region53
    $region52: #{tpu_custom_call.1} parent=1 // pred_region
      %127 = dma.done [#allocation9], 3200
    $region53: #{tpu_custom_call.1} parent=1 // pred_fallthru
      _
    // Predicated region
    $region54: #{tpu_custom_call.1} parent=1 // pred_check
      _
    $region55: #{tpu_custom_call.1} parent=1 // pred_check_branch
      %129 = sbr.rel (0) target = $region57
    $region56: #{tpu_custom_call.1} parent=1 // pred_region
      %130 = dma.done [#allocation9], 16
    $region57: #{tpu_custom_call.1} parent=1 // pred_fallthru
      _
    // Predicated region
    $region58: #{tpu_custom_call.1} parent=1 // pred_check
      _
    $region59: #{tpu_custom_call.1} parent=1 // pred_check_branch
      %132 = sbr.rel (0) target = $region61
    $region60: #{tpu_custom_call.1} parent=1 // pred_region
      %133 = dma.done [#allocation12], 256
    $region61: #{tpu_custom_call.1} parent=1 // pred_fallthru
      _
    // Predicated region
    $region62: #{tpu_custom_call.1} parent=1 // pred_check
      _
    $region63: #{tpu_custom_call.1} parent=1 // pred_check_branch
      %135 = sbr.rel (0) target = $region65
    $region64: #{tpu_custom_call.1} parent=1 // pred_region
      %136 = dma.done [#allocation12], 64
    $region65: #{tpu_custom_call.1} parent=1 // pred_fallthru
      _
    // Predicated region
    $region66: #{tpu_custom_call.1} parent=1 // pred_check
      _
    $region67: #{tpu_custom_call.1} parent=1 // pred_check_branch
      %138 = sbr.rel (0) target = $region69
    $region68: #{tpu_custom_call.1} parent=1 // pred_region
      %139 = dma.done [#allocation15], 35200
    $region69: #{tpu_custom_call.1} parent=1 // pred_fallthru
      _
    // Predicated region
    $region70: #{tpu_custom_call.1} parent=1 // pred_check
      _
    $region71: #{tpu_custom_call.1} parent=1 // pred_check_branch
      %141 = sbr.rel (0) target = $region73
    $region72: #{tpu_custom_call.1} parent=1 // pred_region
      %142 = dma.done [#allocation15], 176
    $region73: #{tpu_custom_call.1} parent=1 // pred_fallthru
      _
    %v144 = vld [vmem:[#allocation2] sm:$0xff]
    %v145 = vld [vmem:[#allocation2 + $0x8] sm:$0xff]
    %v146 = vpack.c.bf16 %v144, %v144
    %v147 = vpack.c.bf16 %v145, %v145
    %v148 = vld [vmem:[#allocation5] sm:$0xff]
    %v149 = vld [vmem:[#allocation5 + $0x8] sm:$0xff]
    %v150 = vld [vmem:[#allocation5 + $0x10] sm:$0xff]
    %v151 = vld [vmem:[#allocation5 + $0x18] sm:$0xff]
    %v152 = vld [vmem:[#allocation5 + $0x20] sm:$0xff]
    %v153 = vld [vmem:[#allocation5 + $0x28] sm:$0xff]
    %v154 = vld [vmem:[#allocation5 + $0x30] sm:$0xff]
    %v155 = vld [vmem:[#allocation5 + $0x38] sm:$0xff]
    %v156 = vld [vmem:[#allocation5 + $0x40] sm:$0xff]
    %v157 = vld [vmem:[#allocation5 + $0x48] sm:$0xff]
    %v158 = vld [vmem:[#allocation5 + $0x50] sm:$0xff]
    %v159 = vld [vmem:[#allocation5 + $0x58] sm:$0xff]
    %v160 = vld [vmem:[#allocation5 + $0x60] sm:$0xff]
    %v161 = vld [vmem:[#allocation5 + $0x68] sm:$0xff]
    %v162 = vld [vmem:[#allocation5 + $0x70] sm:$0xff]
    %v163 = vld [vmem:[#allocation5 + $0x78] sm:$0xff]
    %v164 = vld [vmem:[#allocation5 + $0x80] sm:$0xff]
    %v165 = vld [vmem:[#allocation5 + $0x88] sm:$0xff]
    %v166 = vld [vmem:[#allocation5 + $0x90] sm:$0xff]
    %v167 = vld [vmem:[#allocation5 + $0x98] sm:$0xff]
    %v168 = vld [vmem:[#allocation5 + $0xa0] sm:$0xff]
    %v169 = vld [vmem:[#allocation5 + $0xa8] sm:$0xff]
    %v170 = vld [vmem:[#allocation5 + $0xb0] sm:$0xff]
    %v171 = vld [vmem:[#allocation5 + $0xb8] sm:$0xff]
    %v172 = vld [vmem:[#allocation5 + $0xc0] sm:$0xff]
    %v173 = vld [vmem:[#allocation5 + $0xc8] sm:$0xff]
    %v174 = vld [vmem:[#allocation5 + $0xd0] sm:$0xff]
    %v175 = vld [vmem:[#allocation5 + $0xd8] sm:$0xff]
    %v176 = vld [vmem:[#allocation5 + $0xe0] sm:$0xff]
    %v177 = vld [vmem:[#allocation5 + $0xe8] sm:$0xff]
    %v178 = vld [vmem:[#allocation5 + $0xf0] sm:$0xff]
    %v179 = vld [vmem:[#allocation5 + $0xf8] sm:$0xff]
    %v180 = vld [vmem:[#allocation5 + $0x100] sm:$0xff]
    %v181 = vld [vmem:[#allocation5 + $0x108] sm:$0xff]
    %v182 = vld [vmem:[#allocation5 + $0x110] sm:$0xff]
    %v183 = vld [vmem:[#allocation5 + $0x118] sm:$0xff]
    %v184 = vld [vmem:[#allocation5 + $0x120] sm:$0xff]
    %v185 = vld [vmem:[#allocation5 + $0x128] sm:$0xff]
    %v186 = vld [vmem:[#allocation7] sm:$0xf]
    %v188 = vlaneseq
    %v189 = vshrl.u32 %v188, 7
    %v190 = vsub.s32 0, %v189
    %v191 = vrot.slane %v186, %v190
    %v192 = vlaneseq
    %v193 = vshrl.u32 %v192, 7
    %v194 = vsub.s32 1, %v193
    %v195 = vrot.slane %v186, %v194
    %v196 = vlaneseq
    %v197 = vshrl.u32 %v196, 7
    %v198 = vsub.s32 2, %v197
    %v199 = vrot.slane %v186, %v198
    %v200 = vlaneseq
    %v201 = vshrl.u32 %v200, 7
    %v202 = vsub.s32 3, %v201
    %v203 = vrot.slane %v186, %v202
    %v246 = vunpack.c.l.b16 %v148
    %v247 = vunpack.c.h.b16 %v148
    %v248 = vunpack.c.l.b16 %v149
    %v249 = vunpack.c.h.b16 %v149
    %v250 = vunpack.c.l.b16 %v150
    %v251 = vunpack.c.h.b16 %v150
    %v252 = vunpack.c.l.b16 %v151
    %v253 = vunpack.c.h.b16 %v151
    %v254 = vunpack.c.l.b16 %v152
    %v255 = vunpack.c.h.b16 %v152
    %v256 = vunpack.c.l.b16 %v153
    %v257 = vunpack.c.h.b16 %v153
    %v258 = vunpack.c.l.b16 %v154
    %v259 = vunpack.c.h.b16 %v154
    %v260 = vunpack.c.l.b16 %v155
    %v261 = vunpack.c.h.b16 %v155
    %v262 = vunpack.c.l.b16 %v156
    %v263 = vunpack.c.h.b16 %v156
    %v264 = vunpack.c.l.b16 %v157
    %v265 = vunpack.c.h.b16 %v157
    %v266 = vunpack.c.l.b16 %v158
    %v267 = vunpack.c.h.b16 %v158
    %v268 = vunpack.c.l.b16 %v159
    %v269 = vunpack.c.h.b16 %v159
    %v270 = vunpack.c.l.b16 %v160
    %v271 = vunpack.c.h.b16 %v160
    %v272 = vunpack.c.l.b16 %v161
    %v273 = vunpack.c.h.b16 %v161
    %v274 = vunpack.c.l.b16 %v162
    %v275 = vunpack.c.h.b16 %v162
    %v276 = vunpack.c.l.b16 %v163
    %v277 = vunpack.c.h.b16 %v163
    %v278 = vunpack.c.l.b16 %v164
    %v279 = vunpack.c.h.b16 %v164
    %v280 = vunpack.c.l.b16 %v165
    %v281 = vunpack.c.h.b16 %v165
    %v282 = vunpack.c.l.b16 %v166
    %v283 = vunpack.c.h.b16 %v166
    %v284 = vunpack.c.l.b16 %v167
    %v285 = vunpack.c.h.b16 %v167
    %v286 = vunpack.c.l.b16 %v168
    %v287 = vunpack.c.h.b16 %v168
    %v288 = vunpack.c.l.b16 %v169
    %v289 = vunpack.c.h.b16 %v169
    %v290 = vunpack.c.l.b16 %v170
    %v291 = vunpack.c.h.b16 %v170
    %v292 = vunpack.c.l.b16 %v171
    %v293 = vunpack.c.h.b16 %v171
    %v294 = vunpack.c.l.b16 %v172
    %v295 = vunpack.c.h.b16 %v172
    %v296 = vunpack.c.l.b16 %v173
    %v297 = vunpack.c.h.b16 %v173
    %v298 = vunpack.c.l.b16 %v174
    %v299 = vunpack.c.h.b16 %v174
    %v300 = vunpack.c.l.b16 %v175
    %v301 = vunpack.c.h.b16 %v175
    %v302 = vunpack.c.l.b16 %v176
    %v303 = vunpack.c.h.b16 %v176
    %v304 = vunpack.c.l.b16 %v177
    %v305 = vunpack.c.h.b16 %v177
    %v306 = vunpack.c.l.b16 %v178
    %v307 = vunpack.c.h.b16 %v178
    %v308 = vunpack.c.l.b16 %v179
    %v309 = vunpack.c.h.b16 %v179
    %v310 = vunpack.c.l.b16 %v180
    %v311 = vunpack.c.h.b16 %v180
    %v312 = vunpack.c.l.b16 %v181
    %v313 = vunpack.c.h.b16 %v181
    %v314 = vunpack.c.l.b16 %v182
    %v315 = vunpack.c.h.b16 %v182
    %v316 = vunpack.c.l.b16 %v183
    %v317 = vunpack.c.h.b16 %v183
    %v318 = vunpack.c.l.b16 %v184
    %v319 = vunpack.c.h.b16 %v184
    %v320 = vunpack.c.l.b16 %v185
    %v321 = vunpack.c.h.b16 %v185
    %v322 = vpack.c.b16 %v250, %v246
    %v323 = vpack.c.b16 %v251, %v247
    %v324 = vpack.c.b16 %v252, %v248
    %v325 = vpack.c.b16 %v253, %v249
    %v326 = vpack.c.b16 %v258, %v254
    %v327 = vpack.c.b16 %v259, %v255
    %v328 = vpack.c.b16 %v260, %v256
    %v329 = vpack.c.b16 %v261, %v257
    %v330 = vpack.c.b16 %v266, %v262
    %v331 = vpack.c.b16 %v267, %v263
    %v332 = vpack.c.b16 %v268, %v264
    %v333 = vpack.c.b16 %v269, %v265
    %v334 = vpack.c.b16 %v274, %v270
    %v335 = vpack.c.b16 %v275, %v271
    %v336 = vpack.c.b16 %v276, %v272
    %v337 = vpack.c.b16 %v277, %v273
    %v338 = vpack.c.b16 %v282, %v278
    %v339 = vpack.c.b16 %v283, %v279
    %v340 = vpack.c.b16 %v284, %v280
    %v341 = vpack.c.b16 %v285, %v281
    %v342 = vpack.c.b16 %v290, %v286
    %v343 = vpack.c.b16 %v291, %v287
    %v344 = vpack.c.b16 %v292, %v288
    %v345 = vpack.c.b16 %v293, %v289
    %v346 = vpack.c.b16 %v298, %v294
    %v347 = vpack.c.b16 %v299, %v295
    %v348 = vpack.c.b16 %v300, %v296
    %v349 = vpack.c.b16 %v301, %v297
    %v350 = vpack.c.b16 %v306, %v302
    %v351 = vpack.c.b16 %v307, %v303
    %v352 = vpack.c.b16 %v308, %v304
    %v353 = vpack.c.b16 %v309, %v305
    %v354 = vpack.c.b16 %v314, %v310
    %v355 = vpack.c.b16 %v315, %v311
    %v356 = vpack.c.b16 %v316, %v312
    %v357 = vpack.c.b16 %v317, %v313
    %v358 = vpack.c.b16 %v318, %v318
    %v359 = vpack.c.b16 %v319, %v319
    %v360 = vpack.c.b16 %v320, %v320
    %v361 = vpack.c.b16 %v321, %v321
    %vm398 = vcmask 187392
    %v400 = vsel %vm398, %v147, 0
    %vm402 = vcmask 1042432
    %vm403 = vcmask 1043456
    %v404 = vsel %vm402, 4294967295, 65535
    %v405 = vsel %vm403, %v404, 0
    %v407 = vand.u32 %v358, %v405
    %v410 = vand.u32 %v359, %v405
    %v413 = vand.u32 %v360, %v405
    %v416 = vand.u32 %v361, %v405
    %418 = vmatprep.subr.bf16.mxu0 %v323
    %419 = vmatpush1.bf16.msra.mxu0 %v322
    %420 = vmatprep.subr.bf16.mxu0 %v327
    %421 = vmatpush1.bf16.msra.mxu0 %v326
    %422 = vmatprep.subr.bf16.mxu0 %v331
    %423 = vmatpush1.bf16.msra.mxu0 %v330
    %424 = vmatprep.subr.bf16.mxu0 %v335
    %425 = vmatpush1.bf16.msra.mxu0 %v334
    %426 = vmatprep.subr.bf16.mxu0 %v339
    %427 = vmatpush1.bf16.msra.mxu0 %v338
    %428 = vmatprep.subr.bf16.mxu0 %v343
    %429 = vmatpush1.bf16.msra.mxu0 %v342
    %430 = vmatprep.subr.bf16.mxu0 %v347
    %431 = vmatpush1.bf16.msra.mxu0 %v346
    %432 = vmatprep.subr.bf16.mxu0 %v351
    %433 = vmatpush1.bf16.msra.mxu0 %v350
    %434 = vmatprep.subr.bf16.mxu0 %v355
    %435 = vmatpush1.bf16.msra.mxu0 %v354
    %436 = vmatprep.subr.bf16.mxu0 %v410
    %437 = vmatpush1.bf16.msra.mxu0 %v407
    %438 = vmatprep.subr.bf16.mxu0 0
    %439 = vmatpush1.bf16.msra.mxu0 0
    %440 = vmatprep.subr.bf16.mxu0 0
    %441 = vmatpush1.bf16.msra.mxu0 0
    %442 = vmatprep.subr.bf16.mxu0 0
    %443 = vmatpush1.bf16.msra.mxu0 0
    %444 = vmatprep.subr.bf16.mxu0 0
    %445 = vmatpush1.bf16.msra.mxu0 0
    %446 = vmatprep.subr.bf16.mxu0 0
    %447 = vmatpush1.bf16.msra.mxu0 0
    %448 = vmatprep.subr.bf16.mxu0 0
    %449 = vmatpush1.bf16.msra.mxu0 0
    %450 = vmatprep.mubr.bf16.mxu0 %v400
    %451 = vmatmul.mubr.bf16.gmra.mrb[0].mxu0 %v146
    %v452 = vpop.f32.mrb[0].mxu0
    %v453 = vadd.f32 %v191, %v452
    %v454 = vpop.f32.mrb[0].mxu0
    %v455 = vadd.f32 %v195, %v454
    %v456 = vpop.f32.mrb[0].mxu0
    %v457 = vpop.f32.mrb[0].mxu0
    %458 = vdwg.mxu0
    %459 = vmatprep.subr.bf16.mxu0 %v325
    %460 = vmatpush1.bf16.msra.mxu0 %v324
    %461 = vmatprep.subr.bf16.mxu0 %v329
    %462 = vmatpush1.bf16.msra.mxu0 %v328
    %463 = vmatprep.subr.bf16.mxu0 %v333
    %464 = vmatpush1.bf16.msra.mxu0 %v332
    %465 = vmatprep.subr.bf16.mxu0 %v337
    %466 = vmatpush1.bf16.msra.mxu0 %v336
    %467 = vmatprep.subr.bf16.mxu0 %v341
    %468 = vmatpush1.bf16.msra.mxu0 %v340
    %469 = vmatprep.subr.bf16.mxu0 %v345
    %470 = vmatpush1.bf16.msra.mxu0 %v344
    %471 = vmatprep.subr.bf16.mxu0 %v349
    %472 = vmatpush1.bf16.msra.mxu0 %v348
    %473 = vmatprep.subr.bf16.mxu0 %v353
    %474 = vmatpush1.bf16.msra.mxu0 %v352
    %475 = vmatprep.subr.bf16.mxu0 %v357
    %476 = vmatpush1.bf16.msra.mxu0 %v356
    %477 = vmatprep.subr.bf16.mxu0 %v416
    %478 = vmatpush1.bf16.msra.mxu0 %v413
    %479 = vmatprep.subr.bf16.mxu0 0
    %480 = vmatpush1.bf16.msra.mxu0 0
    %481 = vmatprep.subr.bf16.mxu0 0
    %482 = vmatpush1.bf16.msra.mxu0 0
    %483 = vmatprep.subr.bf16.mxu0 0
    %484 = vmatpush1.bf16.msra.mxu0 0
    %485 = vmatprep.subr.bf16.mxu0 0
    %486 = vmatpush1.bf16.msra.mxu0 0
    %487 = vmatprep.subr.bf16.mxu0 0
    %488 = vmatpush1.bf16.msra.mxu0 0
    %489 = vmatprep.subr.bf16.mxu0 0
    %490 = vmatpush1.bf16.msra.mxu0 0
    %491 = vmatprep.mubr.bf16.mxu0 %v400
    %492 = vmatmul.mubr.bf16.gmra.mrb[0].mxu0 %v146
    %v493 = vpop.f32.mrb[0].mxu0
    %v494 = vadd.f32 %v199, %v493
    %v495 = vpop.f32.mrb[0].mxu0
    %v496 = vadd.f32 %v203, %v495
    %v497 = vpop.f32.mrb[0].mxu0
    %v498 = vpop.f32.mrb[0].mxu0
    %499 = vdwg.mxu0
    %v500 = vmax.f32 %v453, 0.0
    %v501 = vmax.f32 %v455, 0.0
    %v502 = vmax.f32 %v494, 0.0
    %v503 = vmax.f32 %v496, 0.0
    %v504 = vpack.c.bf16 %v500, %v500
    %v505 = vpack.c.bf16 %v501, %v501
    %v506 = vpack.c.bf16 %v502, %v502
    %v507 = vpack.c.bf16 %v503, %v503
    %v508 = vld [vmem:[#allocation8] sm:$0xf]
    %v509 = vld [vmem:[#allocation8 + $0x4] sm:$0xf]
    %v510 = vld [vmem:[#allocation8 + $0x8] sm:$0xf]
    %v511 = vld [vmem:[#allocation8 + $0xc] sm:$0xf]
    %v512 = vld [vmem:[#allocation8 + $0x10] sm:$0xf]
    %v513 = vld [vmem:[#allocation8 + $0x14] sm:$0xf]
    %v514 = vld [vmem:[#allocation8 + $0x18] sm:$0xf]
    %v515 = vld [vmem:[#allocation8 + $0x1c] sm:$0xf]
    %v516 = vld [vmem:[#allocation8 + $0x20] sm:$0xf]
    %v517 = vld [vmem:[#allocation8 + $0x24] sm:$0xf]
    %v518 = vld [vmem:[#allocation8 + $0x28] sm:$0xf]
    %v519 = vld [vmem:[#allocation8 + $0x2c] sm:$0xf]
    %v520 = vld [vmem:[#allocation8 + $0x30] sm:$0xf]
    %v521 = vld [vmem:[#allocation8 + $0x34] sm:$0xf]
    %v522 = vld [vmem:[#allocation8 + $0x38] sm:$0xf]
    %v523 = vld [vmem:[#allocation8 + $0x3c] sm:$0xf]
    %v524 = vld [vmem:[#allocation8 + $0x40] sm:$0xf]
    %v525 = vld [vmem:[#allocation8 + $0x44] sm:$0xf]
    %v526 = vld [vmem:[#allocation8 + $0x48] sm:$0xf]
    %v527 = vld [vmem:[#allocation8 + $0x4c] sm:$0xf]
    %v528 = vld [vmem:[#allocation8 + $0x50] sm:$0xf]
    %v529 = vld [vmem:[#allocation8 + $0x54] sm:$0xf]
    %v530 = vld [vmem:[#allocation8 + $0x58] sm:$0xf]
    %v531 = vld [vmem:[#allocation8 + $0x5c] sm:$0xf]
    %v532 = vld [vmem:[#allocation8 + $0x60] sm:$0xf]
    %v533 = vld [vmem:[#allocation8 + $0x64] sm:$0xf]
    %v534 = vld [vmem:[#allocation8 + $0x68] sm:$0xf]
    %v535 = vld [vmem:[#allocation8 + $0x6c] sm:$0xf]
    %v536 = vld [vmem:[#allocation8 + $0x70] sm:$0xf]
    %v537 = vld [vmem:[#allocation8 + $0x74] sm:$0xf]
    %v538 = vld [vmem:[#allocation8 + $0x78] sm:$0xf]
    %v539 = vld [vmem:[#allocation8 + $0x7c] sm:$0xf]
    %v540 = vld [vmem:[#allocation8 + $0x80] sm:$0xf]
    %v541 = vld [vmem:[#allocation8 + $0x84] sm:$0xf]
    %v542 = vld [vmem:[#allocation8 + $0x88] sm:$0xf]
    %v543 = vld [vmem:[#allocation8 + $0x8c] sm:$0xf]
    %v544 = vld [vmem:[#allocation8 + $0x90] sm:$0xf]
    %v545 = vld [vmem:[#allocation8 + $0x94] sm:$0xf]
    %v546 = vld [vmem:[#allocation8 + $0x98] sm:$0xf]
    %v547 = vld [vmem:[#allocation8 + $0x9c] sm:$0xf]
    %v548 = vld [vmem:[#allocation8 + $0xa0] sm:$0xf]
    %v549 = vld [vmem:[#allocation8 + $0xa4] sm:$0xf]
    %v550 = vld [vmem:[#allocation8 + $0xa8] sm:$0xf]
    %v551 = vld [vmem:[#allocation8 + $0xac] sm:$0xf]
    %v552 = vld [vmem:[#allocation8 + $0xb0] sm:$0xf]
    %v553 = vld [vmem:[#allocation8 + $0xb4] sm:$0xf]
    %v554 = vld [vmem:[#allocation8 + $0xb8] sm:$0xf]
    %v555 = vld [vmem:[#allocation8 + $0xbc] sm:$0xf]
    %v556 = vld [vmem:[#allocation8 + $0xc0] sm:$0xf]
    %v557 = vld [vmem:[#allocation8 + $0xc4] sm:$0xf]
    %v558 = vld [vmem:[#allocation10] sm:$0x1]
    %v560 = vlaneseq
    %v561 = vshrl.u32 %v560, 7
    %v562 = vsub.s32 0, %v561
    %v563 = vrot.slane %v558, %v562
    %v615 = vunpack.c.l.b16 %v508
    %v616 = vunpack.c.l.b16 %v509
    %v617 = vunpack.c.l.b16 %v510
    %v618 = vunpack.c.l.b16 %v511
    %v619 = vunpack.c.l.b16 %v512
    %v620 = vunpack.c.l.b16 %v513
    %v621 = vunpack.c.l.b16 %v514
    %v622 = vunpack.c.l.b16 %v515
    %v623 = vunpack.c.l.b16 %v516
    %v624 = vunpack.c.l.b16 %v517
    %v625 = vunpack.c.l.b16 %v518
    %v626 = vunpack.c.l.b16 %v519
    %v627 = vunpack.c.l.b16 %v520
    %v628 = vunpack.c.l.b16 %v521
    %v629 = vunpack.c.l.b16 %v522
    %v630 = vunpack.c.l.b16 %v523
    %v631 = vunpack.c.l.b16 %v524
    %v632 = vunpack.c.l.b16 %v525
    %v633 = vunpack.c.l.b16 %v526
    %v634 = vunpack.c.l.b16 %v527
    %v635 = vunpack.c.l.b16 %v528
    %v636 = vunpack.c.l.b16 %v529
    %v637 = vunpack.c.l.b16 %v530
    %v638 = vunpack.c.l.b16 %v531
    %v639 = vunpack.c.l.b16 %v532
    %v640 = vunpack.c.l.b16 %v533
    %v641 = vunpack.c.l.b16 %v534
    %v642 = vunpack.c.l.b16 %v535
    %v643 = vunpack.c.l.b16 %v536
    %v644 = vunpack.c.l.b16 %v537
    %v645 = vunpack.c.l.b16 %v538
    %v646 = vunpack.c.l.b16 %v539
    %v647 = vunpack.c.l.b16 %v540
    %v648 = vunpack.c.l.b16 %v541
    %v649 = vunpack.c.l.b16 %v542
    %v650 = vunpack.c.l.b16 %v543
    %v651 = vunpack.c.l.b16 %v544
    %v652 = vunpack.c.l.b16 %v545
    %v653 = vunpack.c.l.b16 %v546
    %v654 = vunpack.c.l.b16 %v547
    %v655 = vunpack.c.l.b16 %v548
    %v656 = vunpack.c.l.b16 %v549
    %v657 = vunpack.c.l.b16 %v550
    %v658 = vunpack.c.l.b16 %v551
    %v659 = vunpack.c.l.b16 %v552
    %v660 = vunpack.c.l.b16 %v553
    %v661 = vunpack.c.l.b16 %v554
    %v662 = vunpack.c.l.b16 %v555
    %v663 = vunpack.c.l.b16 %v556
    %v664 = vunpack.c.l.b16 %v557
    %v665 = vpack.c.b16 %v616, %v615
    %v666 = vpack.c.b16 %v618, %v617
    %v667 = vpack.c.b16 %v620, %v619
    %v668 = vpack.c.b16 %v622, %v621
    %v669 = vpack.c.b16 %v624, %v623
    %v670 = vpack.c.b16 %v626, %v625
    %v671 = vpack.c.b16 %v628, %v627
    %v672 = vpack.c.b16 %v630, %v629
    %v673 = vpack.c.b16 %v632, %v631
    %v674 = vpack.c.b16 %v634, %v633
    %v675 = vpack.c.b16 %v636, %v635
    %v676 = vpack.c.b16 %v638, %v637
    %v677 = vpack.c.b16 %v640, %v639
    %v678 = vpack.c.b16 %v642, %v641
    %v679 = vpack.c.b16 %v644, %v643
    %v680 = vpack.c.b16 %v646, %v645
    %v681 = vpack.c.b16 %v648, %v647
    %v682 = vpack.c.b16 %v650, %v649
    %v683 = vpack.c.b16 %v652, %v651
    %v684 = vpack.c.b16 %v654, %v653
    %v685 = vpack.c.b16 %v656, %v655
    %v686 = vpack.c.b16 %v658, %v657
    %v687 = vpack.c.b16 %v660, %v659
    %v688 = vpack.c.b16 %v662, %v661
    %v689 = vpack.c.b16 %v664, %v663
    %vm715 = vcmask 130048
    %v717 = vsel %vm715, %v507, 0
    %719 = vmatprep.subr.bf16.mxu0 0
    %720 = vmatpush1.bf16.msra.mxu0 %v665
    %721 = vmatprep.subr.bf16.mxu0 0
    %722 = vmatpush1.bf16.msra.mxu0 %v666
    %723 = vmatprep.subr.bf16.mxu0 0
    %724 = vmatpush1.bf16.msra.mxu0 %v667
    %725 = vmatprep.subr.bf16.mxu0 0
    %726 = vmatpush1.bf16.msra.mxu0 %v668
    %727 = vmatprep.subr.bf16.mxu0 0
    %728 = vmatpush1.bf16.msra.mxu0 %v669
    %729 = vmatprep.subr.bf16.mxu0 0
    %730 = vmatpush1.bf16.msra.mxu0 %v670
    %731 = vmatprep.subr.bf16.mxu0 0
    %732 = vmatpush1.bf16.msra.mxu0 %v671
    %733 = vmatprep.subr.bf16.mxu0 0
    %734 = vmatpush1.bf16.msra.mxu0 %v672
    %735 = vmatprep.subr.bf16.mxu0 0
    %736 = vmatpush1.bf16.msra.mxu0 %v673
    %737 = vmatprep.subr.bf16.mxu0 0
    %738 = vmatpush1.bf16.msra.mxu0 %v674
    %739 = vmatprep.subr.bf16.mxu0 0
    %740 = vmatpush1.bf16.msra.mxu0 %v675
    %741 = vmatprep.subr.bf16.mxu0 0
    %742 = vmatpush1.bf16.msra.mxu0 %v676
    %743 = vmatprep.subr.bf16.mxu0 0
    %744 = vmatpush1.bf16.msra.mxu0 %v677
    %745 = vmatprep.subr.bf16.mxu0 0
    %746 = vmatpush1.bf16.msra.mxu0 %v678
    %747 = vmatprep.subr.bf16.mxu0 0
    %748 = vmatpush1.bf16.msra.mxu0 %v679
    %749 = vmatprep.subr.bf16.mxu0 0
    %750 = vmatpush1.bf16.msra.mxu0 %v680
    %751 = vmatprep.mubr.bf16.mxu0 %v505
    %752 = vmatmul.mubr.bf16.gmra.mrb[0].mxu0 %v504
    %v753 = vpop.f32.mrb[0].mxu0
    %v754 = vadd.f32 %v563, %v753
    %v755 = vpop.f32.mrb[0].mxu0
    %v756 = vpop.f32.mrb[0].mxu0
    %v757 = vpop.f32.mrb[0].mxu0
    %758 = vdwg.mxu0
    %759 = vmatprep.subr.bf16.mxu0 0
    %760 = vmatpush1.bf16.msra.mxu0 %v681
    %761 = vmatprep.subr.bf16.mxu0 0
    %762 = vmatpush1.bf16.msra.mxu0 %v682
    %763 = vmatprep.subr.bf16.mxu0 0
    %764 = vmatpush1.bf16.msra.mxu0 %v683
    %765 = vmatprep.subr.bf16.mxu0 0
    %766 = vmatpush1.bf16.msra.mxu0 %v684
    %767 = vmatprep.subr.bf16.mxu0 0
    %768 = vmatpush1.bf16.msra.mxu0 %v685
    %769 = vmatprep.subr.bf16.mxu0 0
    %770 = vmatpush1.bf16.msra.mxu0 %v686
    %771 = vmatprep.subr.bf16.mxu0 0
    %772 = vmatpush1.bf16.msra.mxu0 %v687
    %773 = vmatprep.subr.bf16.mxu0 0
    %774 = vmatpush1.bf16.msra.mxu0 %v688
    %775 = vmatprep.subr.bf16.mxu0 0
    %776 = vmatpush1.bf16.msra.mxu0 %v689
    %777 = vmatprep.subr.bf16.mxu0 0
    %778 = vmatpush1.bf16.msra.mxu0 0
    %779 = vmatprep.subr.bf16.mxu0 0
    %780 = vmatpush1.bf16.msra.mxu0 0
    %781 = vmatprep.subr.bf16.mxu0 0
    %782 = vmatpush1.bf16.msra.mxu0 0
    %783 = vmatprep.subr.bf16.mxu0 0
    %784 = vmatpush1.bf16.msra.mxu0 0
    %785 = vmatprep.subr.bf16.mxu0 0
    %786 = vmatpush1.bf16.msra.mxu0 0
    %787 = vmatprep.subr.bf16.mxu0 0
    %788 = vmatpush1.bf16.msra.mxu0 0
    %789 = vmatprep.subr.bf16.mxu0 0
    %790 = vmatpush1.bf16.msra.mxu0 0
    %791 = vmatprep.mubr.bf16.mxu0 %v717
    %792 = vmatmul.mubr.bf16.gmra.mrb[0].mxu0 %v506
    %v793 = vpop.f32.mrb[0].mxu0
    %v794 = vadd.f32 %v754, %v793
    %v795 = vpop.f32.mrb[0].mxu0
    %v796 = vpop.f32.mrb[0].mxu0
    %v797 = vpop.f32.mrb[0].mxu0
    %798 = vdwg.mxu0
    %v799 = vpack.c.bf16 %v794, %v794
    %v800 = vld [vmem:[#allocation11] sm:$0x77]
    %v801 = vld [vmem:[#allocation11 + $0x8] sm:$0x77]
    %v802 = vld [vmem:[#allocation13] sm:$0xf]
    %v804 = vlaneseq
    %v805 = vshrl.u32 %v804, 7
    %v806 = vsub.s32 0, %v805
    %v807 = vrot.slane %v802, %v806
    %v808 = vlaneseq
    %v809 = vshrl.u32 %v808, 7
    %v810 = vsub.s32 1, %v809
    %v811 = vrot.slane %v802, %v810
    %v812 = vlaneseq
    %v813 = vshrl.u32 %v812, 7
    %v814 = vsub.s32 2, %v813
    %v815 = vrot.slane %v802, %v814
    %v816 = vlaneseq
    %v817 = vshrl.u32 %v816, 7
    %v818 = vsub.s32 3, %v817
    %v819 = vrot.slane %v802, %v818
    %v826 = vunpack.c.l.b16 %v800
    %v827 = vunpack.c.h.b16 %v800
    %v828 = vunpack.c.l.b16 %v801
    %v829 = vunpack.c.h.b16 %v801
    %v830 = vpack.c.b16 %v826, %v826
    %v831 = vpack.c.b16 %v827, %v827
    %v832 = vpack.c.b16 %v828, %v828
    %v833 = vpack.c.b16 %v829, %v829
    %vm834 = vcmask 39936
    %v836 = vsel %vm834, %v799, 0
    %vm838 = vcmask 1041408
    %v839 = vsel %vm838, 4294967295, 65535
    %v840 = vsel %vm402, %v839, 0
    %v842 = vand.u32 %v830, %v840
    %v845 = vand.u32 %v831, %v840
    %v848 = vand.u32 %v832, %v840
    %v851 = vand.u32 %v833, %v840
    %853 = vmatprep.subr.bf16.mxu0 %v845
    %854 = vmatpush1.bf16.msra.mxu0 %v842
    %855 = vmatprep.subr.bf16.mxu0 0
    %856 = vmatpush1.bf16.msra.mxu0 0
    %857 = vmatprep.subr.bf16.mxu0 0
    %858 = vmatpush1.bf16.msra.mxu0 0
    %859 = vmatprep.subr.bf16.mxu0 0
    %860 = vmatpush1.bf16.msra.mxu0 0
    %861 = vmatprep.subr.bf16.mxu0 0
    %862 = vmatpush1.bf16.msra.mxu0 0
    %863 = vmatprep.subr.bf16.mxu0 0
    %864 = vmatpush1.bf16.msra.mxu0 0
    %865 = vmatprep.subr.bf16.mxu0 0
    %866 = vmatpush1.bf16.msra.mxu0 0
    %867 = vmatprep.subr.bf16.mxu0 0
    %868 = vmatpush1.bf16.msra.mxu0 0
    %869 = vmatprep.subr.bf16.mxu0 0
    %870 = vmatpush1.bf16.msra.mxu0 0
    %871 = vmatprep.subr.bf16.mxu0 0
    %872 = vmatpush1.bf16.msra.mxu0 0
    %873 = vmatprep.subr.bf16.mxu0 0
    %874 = vmatpush1.bf16.msra.mxu0 0
    %875 = vmatprep.subr.bf16.mxu0 0
    %876 = vmatpush1.bf16.msra.mxu0 0
    %877 = vmatprep.subr.bf16.mxu0 0
    %878 = vmatpush1.bf16.msra.mxu0 0
    %879 = vmatprep.subr.bf16.mxu0 0
    %880 = vmatpush1.bf16.msra.mxu0 0
    %881 = vmatprep.subr.bf16.mxu0 0
    %882 = vmatpush1.bf16.msra.mxu0 0
    %883 = vmatprep.subr.bf16.mxu0 0
    %884 = vmatpush1.bf16.msra.mxu0 0
    %885 = vmatprep.mubr.bf16.mxu0 0
    %886 = vmatmul.mubr.bf16.gmra.mrb[0].mxu0 %v836
    %v887 = vpop.f32.mrb[0].mxu0
    %v888 = vadd.f32 %v807, %v887
    %v889 = vpop.f32.mrb[0].mxu0
    %v890 = vadd.f32 %v811, %v889
    %v891 = vpop.f32.mrb[0].mxu0
    %v892 = vpop.f32.mrb[0].mxu0
    %893 = vdwg.mxu0
    %894 = vmatprep.subr.bf16.mxu0 %v851
    %895 = vmatpush1.bf16.msra.mxu0 %v848
    %896 = vmatprep.subr.bf16.mxu0 0
    %897 = vmatpush1.bf16.msra.mxu0 0
    %898 = vmatprep.subr.bf16.mxu0 0
    %899 = vmatpush1.bf16.msra.mxu0 0
    %900 = vmatprep.subr.bf16.mxu0 0
    %901 = vmatpush1.bf16.msra.mxu0 0
    %902 = vmatprep.subr.bf16.mxu0 0
    %903 = vmatpush1.bf16.msra.mxu0 0
    %904 = vmatprep.subr.bf16.mxu0 0
    %905 = vmatpush1.bf16.msra.mxu0 0
    %906 = vmatprep.subr.bf16.mxu0 0
    %907 = vmatpush1.bf16.msra.mxu0 0
    %908 = vmatprep.subr.bf16.mxu0 0
    %909 = vmatpush1.bf16.msra.mxu0 0
    %910 = vmatprep.subr.bf16.mxu0 0
    %911 = vmatpush1.bf16.msra.mxu0 0
    %912 = vmatprep.subr.bf16.mxu0 0
    %913 = vmatpush1.bf16.msra.mxu0 0
    %914 = vmatprep.subr.bf16.mxu0 0
    %915 = vmatpush1.bf16.msra.mxu0 0
    %916 = vmatprep.subr.bf16.mxu0 0
    %917 = vmatpush1.bf16.msra.mxu0 0
    %918 = vmatprep.subr.bf16.mxu0 0
    %919 = vmatpush1.bf16.msra.mxu0 0
    %920 = vmatprep.subr.bf16.mxu0 0
    %921 = vmatpush1.bf16.msra.mxu0 0
    %922 = vmatprep.subr.bf16.mxu0 0
    %923 = vmatpush1.bf16.msra.mxu0 0
    %924 = vmatprep.subr.bf16.mxu0 0
    %925 = vmatpush1.bf16.msra.mxu0 0
    %926 = vmatprep.mubr.bf16.mxu0 0
    %927 = vmatmul.mubr.bf16.gmra.mrb[0].mxu0 %v836
    %v928 = vpop.f32.mrb[0].mxu0
    %v929 = vadd.f32 %v815, %v928
    %v930 = vpop.f32.mrb[0].mxu0
    %v931 = vadd.f32 %v819, %v930
    %v932 = vpop.f32.mrb[0].mxu0
    %v933 = vpop.f32.mrb[0].mxu0
    %934 = vdwg.mxu0
    %v935 = vmax.f32 %v888, 0.0
    %v936 = vmax.f32 %v890, 0.0
    %v937 = vmax.f32 %v929, 0.0
    %v938 = vmax.f32 %v931, 0.0
    %v939 = vpack.c.bf16 %v935, %v935
    %v940 = vpack.c.bf16 %v936, %v936
    %v941 = vpack.c.bf16 %v937, %v937
    %v942 = vpack.c.bf16 %v938, %v938
    %v943 = vld [vmem:[#allocation14] sm:$0xff]
    %v944 = vld [vmem:[#allocation14 + $0x8] sm:$0xff]
    %v945 = vld [vmem:[#allocation14 + $0x10] sm:$0xff]
    %v946 = vld [vmem:[#allocation14 + $0x18] sm:$0xff]
    %v947 = vld [vmem:[#allocation14 + $0x20] sm:$0xff]
    %v948 = vld [vmem:[#allocation14 + $0x28] sm:$0xf]
    %v949 = vld [vmem:[#allocation14 + $0x2c] sm:$0xff]
    %v950 = vld [vmem:[#allocation14 + $0x34] sm:$0xff]
    %v951 = vld [vmem:[#allocation14 + $0x3c] sm:$0xff]
    %v952 = vld [vmem:[#allocation14 + $0x44] sm:$0xff]
    %v953 = vld [vmem:[#allocation14 + $0x4c] sm:$0xff]
    %v954 = vld [vmem:[#allocation14 + $0x54] sm:$0xf]
    %v955 = vld [vmem:[#allocation14 + $0x58] sm:$0xff]
    %v956 = vld [vmem:[#allocation14 + $0x60] sm:$0xff]
    %v957 = vld [vmem:[#allocation14 + $0x68] sm:$0xff]
    %v958 = vld [vmem:[#allocation14 + $0x70] sm:$0xff]
    %v959 = vld [vmem:[#allocation14 + $0x78] sm:$0xff]
    %v960 = vld [vmem:[#allocation14 + $0x80] sm:$0xf]
    %v961 = vld [vmem:[#allocation14 + $0x84] sm:$0xff]
    %v962 = vld [vmem:[#allocation14 + $0x8c] sm:$0xff]
    %v963 = vld [vmem:[#allocation14 + $0x94] sm:$0xff]
    %v964 = vld [vmem:[#allocation14 + $0x9c] sm:$0xff]
    %v965 = vld [vmem:[#allocation14 + $0xa4] sm:$0xff]
    %v966 = vld [vmem:[#allocation14 + $0xac] sm:$0xf]
    %v967 = vld [vmem:[#allocation14 + $0xb0] sm:$0xff]
    %v968 = vld [vmem:[#allocation14 + $0xb8] sm:$0xff]
    %v969 = vld [vmem:[#allocation14 + $0xc0] sm:$0xff]
    %v970 = vld [vmem:[#allocation14 + $0xc8] sm:$0xff]
    %v971 = vld [vmem:[#allocation14 + $0xd0] sm:$0xff]
    %v972 = vld [vmem:[#allocation14 + $0xd8] sm:$0xf]
    %v973 = vld [vmem:[#allocation14 + $0xdc] sm:$0xff]
    %v974 = vld [vmem:[#allocation14 + $0xe4] sm:$0xff]
    %v975 = vld [vmem:[#allocation14 + $0xec] sm:$0xff]
    %v976 = vld [vmem:[#allocation14 + $0xf4] sm:$0xff]
    %v977 = vld [vmem:[#allocation14 + $0xfc] sm:$0xff]
    %v978 = vld [vmem:[#allocation14 + $0x104] sm:$0xf]
    %v979 = vld [vmem:[#allocation14 + $0x108] sm:$0xff]
    %v980 = vld [vmem:[#allocation14 + $0x110] sm:$0xff]
    %v981 = vld [vmem:[#allocation14 + $0x118] sm:$0xff]
    %v982 = vld [vmem:[#allocation14 + $0x120] sm:$0xff]
    %v983 = vld [vmem:[#allocation14 + $0x128] sm:$0xff]
    %v984 = vld [vmem:[#allocation14 + $0x130] sm:$0xf]
    %v985 = vld [vmem:[#allocation14 + $0x134] sm:$0xff]
    %v986 = vld [vmem:[#allocation14 + $0x13c] sm:$0xff]
    %v987 = vld [vmem:[#allocation14 + $0x144] sm:$0xff]
    %v988 = vld [vmem:[#allocation14 + $0x14c] sm:$0xff]
    %v989 = vld [vmem:[#allocation14 + $0x154] sm:$0xff]
    %v990 = vld [vmem:[#allocation14 + $0x15c] sm:$0xf]
    %v991 = vld [vmem:[#allocation14 + $0x160] sm:$0xff]
    %v992 = vld [vmem:[#allocation14 + $0x168] sm:$0xff]
    %v993 = vld [vmem:[#allocation14 + $0x170] sm:$0xff]
    %v994 = vld [vmem:[#allocation14 + $0x178] sm:$0xff]
    %v995 = vld [vmem:[#allocation14 + $0x180] sm:$0xff]
    %v996 = vld [vmem:[#allocation14 + $0x188] sm:$0xf]
    %v997 = vld [vmem:[#allocation14 + $0x18c] sm:$0xff]
    %v998 = vld [vmem:[#allocation14 + $0x194] sm:$0xff]
    %v999 = vld [vmem:[#allocation14 + $0x19c] sm:$0xff]
    %v1000 = vld [vmem:[#allocation14 + $0x1a4] sm:$0xff]
    %v1001 = vld [vmem:[#allocation14 + $0x1ac] sm:$0xff]
    %v1002 = vld [vmem:[#allocation14 + $0x1b4] sm:$0xf]
    %v1003 = vld [vmem:[#allocation14 + $0x1b8] sm:$0xff]
    %v1004 = vld [vmem:[#allocation14 + $0x1c0] sm:$0xff]
    %v1005 = vld [vmem:[#allocation14 + $0x1c8] sm:$0xff]
    %v1006 = vld [vmem:[#allocation14 + $0x1d0] sm:$0xff]
    %v1007 = vld [vmem:[#allocation14 + $0x1d8] sm:$0xff]
    %v1008 = vld [vmem:[#allocation14 + $0x1e0] sm:$0xf]
    %v1009 = vld [vmem:[#allocation14 + $0x1e4] sm:$0xff]
    %v1010 = vld [vmem:[#allocation14 + $0x1ec] sm:$0xff]
    %v1011 = vld [vmem:[#allocation14 + $0x1f4] sm:$0xff]
    %v1012 = vld [vmem:[#allocation14 + $0x1fc] sm:$0xff]
    %v1013 = vld [vmem:[#allocation14 + $0x204] sm:$0xff]
    %v1014 = vld [vmem:[#allocation14 + $0x20c] sm:$0xf]
    %v1015 = vld [vmem:[#allocation14 + $0x210] sm:$0xff]
    %v1016 = vld [vmem:[#allocation14 + $0x218] sm:$0xff]
    %v1017 = vld [vmem:[#allocation14 + $0x220] sm:$0xff]
    %v1018 = vld [vmem:[#allocation14 + $0x228] sm:$0xff]
    %v1019 = vld [vmem:[#allocation14 + $0x230] sm:$0xff]
    %v1020 = vld [vmem:[#allocation14 + $0x238] sm:$0xf]
    %v1021 = vld [vmem:[#allocation14 + $0x23c] sm:$0xff]
    %v1022 = vld [vmem:[#allocation14 + $0x244] sm:$0xff]
    %v1023 = vld [vmem:[#allocation14 + $0x24c] sm:$0xff]
    %v1024 = vld [vmem:[#allocation14 + $0x254] sm:$0xff]
    %v1025 = vld [vmem:[#allocation14 + $0x25c] sm:$0xff]
    %v1026 = vld [vmem:[#allocation14 + $0x264] sm:$0xf]
    %v1027 = vld [vmem:[#allocation14 + $0x268] sm:$0xff]
    %v1028 = vld [vmem:[#allocation14 + $0x270] sm:$0xff]
    %v1029 = vld [vmem:[#allocation14 + $0x278] sm:$0xff]
    %v1030 = vld [vmem:[#allocation14 + $0x280] sm:$0xff]
    %v1031 = vld [vmem:[#allocation14 + $0x288] sm:$0xff]
    %v1032 = vld [vmem:[#allocation14 + $0x290] sm:$0xf]
    %v1033 = vld [vmem:[#allocation14 + $0x294] sm:$0xff]
    %v1034 = vld [vmem:[#allocation14 + $0x29c] sm:$0xff]
    %v1035 = vld [vmem:[#allocation14 + $0x2a4] sm:$0xff]
    %v1036 = vld [vmem:[#allocation14 + $0x2ac] sm:$0xff]
    %v1037 = vld [vmem:[#allocation14 + $0x2b4] sm:$0xff]
    %v1038 = vld [vmem:[#allocation14 + $0x2bc] sm:$0xf]
    %v1039 = vld [vmem:[#allocation14 + $0x2c0] sm:$0xff]
    %v1040 = vld [vmem:[#allocation14 + $0x2c8] sm:$0xff]
    %v1041 = vld [vmem:[#allocation14 + $0x2d0] sm:$0xff]
    %v1042 = vld [vmem:[#allocation14 + $0x2d8] sm:$0xff]
    %v1043 = vld [vmem:[#allocation14 + $0x2e0] sm:$0xff]
    %v1044 = vld [vmem:[#allocation14 + $0x2e8] sm:$0xf]
    %v1045 = vld [vmem:[#allocation14 + $0x2ec] sm:$0xff]
    %v1046 = vld [vmem:[#allocation14 + $0x2f4] sm:$0xff]
    %v1047 = vld [vmem:[#allocation14 + $0x2fc] sm:$0xff]
    %v1048 = vld [vmem:[#allocation14 + $0x304] sm:$0xff]
    %v1049 = vld [vmem:[#allocation14 + $0x30c] sm:$0xff]
    %v1050 = vld [vmem:[#allocation14 + $0x314] sm:$0xf]
    %v1051 = vld [vmem:[#allocation14 + $0x318] sm:$0xff]
    %v1052 = vld [vmem:[#allocation14 + $0x320] sm:$0xff]
    %v1053 = vld [vmem:[#allocation14 + $0x328] sm:$0xff]
    %v1054 = vld [vmem:[#allocation14 + $0x330] sm:$0xff]
    %v1055 = vld [vmem:[#allocation14 + $0x338] sm:$0xff]
    %v1056 = vld [vmem:[#allocation14 + $0x340] sm:$0xf]
    %v1057 = vld [vmem:[#allocation14 + $0x344] sm:$0xff]
    %v1058 = vld [vmem:[#allocation14 + $0x34c] sm:$0xff]
    %v1059 = vld [vmem:[#allocation14 + $0x354] sm:$0xff]
    %v1060 = vld [vmem:[#allocation14 + $0x35c] sm:$0xff]
    %v1061 = vld [vmem:[#allocation14 + $0x364] sm:$0xff]
    %v1062 = vld [vmem:[#allocation14 + $0x36c] sm:$0xf]
    %v1063 = vld [vmem:[#allocation14 + $0x370] sm:$0xff]
    %v1064 = vld [vmem:[#allocation14 + $0x378] sm:$0xff]
    %v1065 = vld [vmem:[#allocation14 + $0x380] sm:$0xff]
    %v1066 = vld [vmem:[#allocation14 + $0x388] sm:$0xff]
    %v1067 = vld [vmem:[#allocation14 + $0x390] sm:$0xff]
    %v1068 = vld [vmem:[#allocation14 + $0x398] sm:$0xf]
    %v1069 = vld [vmem:[#allocation14 + $0x39c] sm:$0xff]
    %v1070 = vld [vmem:[#allocation14 + $0x3a4] sm:$0xff]
    %v1071 = vld [vmem:[#allocation14 + $0x3ac] sm:$0xff]
    %v1072 = vld [vmem:[#allocation14 + $0x3b4] sm:$0xff]
    %v1073 = vld [vmem:[#allocation14 + $0x3bc] sm:$0xff]
    %v1074 = vld [vmem:[#allocation14 + $0x3c4] sm:$0xf]
    %v1075 = vld [vmem:[#allocation14 + $0x3c8] sm:$0xff]
    %v1076 = vld [vmem:[#allocation14 + $0x3d0] sm:$0xff]
    %v1077 = vld [vmem:[#allocation14 + $0x3d8] sm:$0xff]
    %v1078 = vld [vmem:[#allocation14 + $0x3e0] sm:$0xff]
    %v1079 = vld [vmem:[#allocation14 + $0x3e8] sm:$0xff]
    %v1080 = vld [vmem:[#allocation14 + $0x3f0] sm:$0xf]
    %v1081 = vld [vmem:[#allocation14 + $0x3f4] sm:$0xff]
    %v1082 = vld [vmem:[#allocation14 + $0x3fc] sm:$0xff]
    %v1083 = vld [vmem:[#allocation14 + $0x404] sm:$0xff]
    %v1084 = vld [vmem:[#allocation14 + $0x40c] sm:$0xff]
    %v1085 = vld [vmem:[#allocation14 + $0x414] sm:$0xff]
    %v1086 = vld [vmem:[#allocation14 + $0x41c] sm:$0xf]
    %v1087 = vld [vmem:[#allocation14 + $0x420] sm:$0xff]
    %v1088 = vld [vmem:[#allocation14 + $0x428] sm:$0xff]
    %v1089 = vld [vmem:[#allocation14 + $0x430] sm:$0xff]
    %v1090 = vld [vmem:[#allocation14 + $0x438] sm:$0xff]
    %v1091 = vld [vmem:[#allocation14 + $0x440] sm:$0xff]
    %v1092 = vld [vmem:[#allocation14 + $0x448] sm:$0xf]
    %v1093 = vld [vmem:[#allocation14 + $0x44c] sm:$0xff]
    %v1094 = vld [vmem:[#allocation14 + $0x454] sm:$0xff]
    %v1095 = vld [vmem:[#allocation14 + $0x45c] sm:$0xff]
    %v1096 = vld [vmem:[#allocation14 + $0x464] sm:$0xff]
    %v1097 = vld [vmem:[#allocation14 + $0x46c] sm:$0xff]
    %v1098 = vld [vmem:[#allocation14 + $0x474] sm:$0xf]
    %v1099 = vld [vmem:[#allocation14 + $0x478] sm:$0xff]
    %v1100 = vld [vmem:[#allocation14 + $0x480] sm:$0xff]
    %v1101 = vld [vmem:[#allocation14 + $0x488] sm:$0xff]
    %v1102 = vld [vmem:[#allocation14 + $0x490] sm:$0xff]
    %v1103 = vld [vmem:[#allocation14 + $0x498] sm:$0xff]
    %v1104 = vld [vmem:[#allocation14 + $0x4a0] sm:$0xf]
    %v1105 = vld [vmem:[#allocation14 + $0x4a4] sm:$0xff]
    %v1106 = vld [vmem:[#allocation14 + $0x4ac] sm:$0xff]
    %v1107 = vld [vmem:[#allocation14 + $0x4b4] sm:$0xff]
    %v1108 = vld [vmem:[#allocation14 + $0x4bc] sm:$0xff]
    %v1109 = vld [vmem:[#allocation14 + $0x4c4] sm:$0xff]
    %v1110 = vld [vmem:[#allocation14 + $0x4cc] sm:$0xf]
    %v1111 = vld [vmem:[#allocation14 + $0x4d0] sm:$0xff]
    %v1112 = vld [vmem:[#allocation14 + $0x4d8] sm:$0xff]
    %v1113 = vld [vmem:[#allocation14 + $0x4e0] sm:$0xff]
    %v1114 = vld [vmem:[#allocation14 + $0x4e8] sm:$0xff]
    %v1115 = vld [vmem:[#allocation14 + $0x4f0] sm:$0xff]
    %v1116 = vld [vmem:[#allocation14 + $0x4f8] sm:$0xf]
    %v1117 = vld [vmem:[#allocation14 + $0x4fc] sm:$0xff]
    %v1118 = vld [vmem:[#allocation14 + $0x504] sm:$0xff]
    %v1119 = vld [vmem:[#allocation14 + $0x50c] sm:$0xff]
    %v1120 = vld [vmem:[#allocation14 + $0x514] sm:$0xff]
    %v1121 = vld [vmem:[#allocation14 + $0x51c] sm:$0xff]
    %v1122 = vld [vmem:[#allocation14 + $0x524] sm:$0xf]
    %v1123 = vld [vmem:[#allocation14 + $0x528] sm:$0xff]
    %v1124 = vld [vmem:[#allocation14 + $0x530] sm:$0xff]
    %v1125 = vld [vmem:[#allocation14 + $0x538] sm:$0xff]
    %v1126 = vld [vmem:[#allocation14 + $0x540] sm:$0xff]
    %v1127 = vld [vmem:[#allocation14 + $0x548] sm:$0xff]
    %v1128 = vld [vmem:[#allocation14 + $0x550] sm:$0xf]
    %v1129 = vld [vmem:[#allocation14 + $0x554] sm:$0xff]
    %v1130 = vld [vmem:[#allocation14 + $0x55c] sm:$0xff]
    %v1131 = vld [vmem:[#allocation14 + $0x564] sm:$0xff]
    %v1132 = vld [vmem:[#allocation14 + $0x56c] sm:$0xff]
    %v1133 = vld [vmem:[#allocation14 + $0x574] sm:$0xff]
    %v1134 = vld [vmem:[#allocation14 + $0x57c] sm:$0xf]
    %v1135 = vld [vmem:[#allocation14 + $0x580] sm:$0xff]
    %v1136 = vld [vmem:[#allocation14 + $0x588] sm:$0xff]
    %v1137 = vld [vmem:[#allocation14 + $0x590] sm:$0xff]
    %v1138 = vld [vmem:[#allocation14 + $0x598] sm:$0xff]
    %v1139 = vld [vmem:[#allocation14 + $0x5a0] sm:$0xff]
    %v1140 = vld [vmem:[#allocation14 + $0x5a8] sm:$0xf]
    %v1141 = vld [vmem:[#allocation14 + $0x5ac] sm:$0xff]
    %v1142 = vld [vmem:[#allocation14 + $0x5b4] sm:$0xff]
    %v1143 = vld [vmem:[#allocation14 + $0x5bc] sm:$0xff]
    %v1144 = vld [vmem:[#allocation14 + $0x5c4] sm:$0xff]
    %v1145 = vld [vmem:[#allocation14 + $0x5cc] sm:$0xff]
    %v1146 = vld [vmem:[#allocation14 + $0x5d4] sm:$0xf]
    %v1147 = vld [vmem:[#allocation14 + $0x5d8] sm:$0xff]
    %v1148 = vld [vmem:[#allocation14 + $0x5e0] sm:$0xff]
    %v1149 = vld [vmem:[#allocation14 + $0x5e8] sm:$0xff]
    %v1150 = vld [vmem:[#allocation14 + $0x5f0] sm:$0xff]
    %v1151 = vld [vmem:[#allocation14 + $0x5f8] sm:$0xff]
    %v1152 = vld [vmem:[#allocation14 + $0x600] sm:$0xf]
    %v1153 = vld [vmem:[#allocation14 + $0x604] sm:$0xff]
    %v1154 = vld [vmem:[#allocation14 + $0x60c] sm:$0xff]
    %v1155 = vld [vmem:[#allocation14 + $0x614] sm:$0xff]
    %v1156 = vld [vmem:[#allocation14 + $0x61c] sm:$0xff]
    %v1157 = vld [vmem:[#allocation14 + $0x624] sm:$0xff]
    %v1158 = vld [vmem:[#allocation14 + $0x62c] sm:$0xf]
    %v1159 = vld [vmem:[#allocation14 + $0x630] sm:$0xff]
    %v1160 = vld [vmem:[#allocation14 + $0x638] sm:$0xff]
    %v1161 = vld [vmem:[#allocation14 + $0x640] sm:$0xff]
    %v1162 = vld [vmem:[#allocation14 + $0x648] sm:$0xff]
    %v1163 = vld [vmem:[#allocation14 + $0x650] sm:$0xff]
    %v1164 = vld [vmem:[#allocation14 + $0x658] sm:$0xf]
    %v1165 = vld [vmem:[#allocation14 + $0x65c] sm:$0xff]
    %v1166 = vld [vmem:[#allocation14 + $0x664] sm:$0xff]
    %v1167 = vld [vmem:[#allocation14 + $0x66c] sm:$0xff]
    %v1168 = vld [vmem:[#allocation14 + $0x674] sm:$0xff]
    %v1169 = vld [vmem:[#allocation14 + $0x67c] sm:$0xff]
    %v1170 = vld [vmem:[#allocation14 + $0x684] sm:$0xf]
    %v1171 = vld [vmem:[#allocation14 + $0x688] sm:$0xff]
    %v1172 = vld [vmem:[#allocation14 + $0x690] sm:$0xff]
    %v1173 = vld [vmem:[#allocation14 + $0x698] sm:$0xff]
    %v1174 = vld [vmem:[#allocation14 + $0x6a0] sm:$0xff]
    %v1175 = vld [vmem:[#allocation14 + $0x6a8] sm:$0xff]
    %v1176 = vld [vmem:[#allocation14 + $0x6b0] sm:$0xf]
    %v1177 = vld [vmem:[#allocation14 + $0x6b4] sm:$0xff]
    %v1178 = vld [vmem:[#allocation14 + $0x6bc] sm:$0xff]
    %v1179 = vld [vmem:[#allocation14 + $0x6c4] sm:$0xff]
    %v1180 = vld [vmem:[#allocation14 + $0x6cc] sm:$0xff]
    %v1181 = vld [vmem:[#allocation14 + $0x6d4] sm:$0xff]
    %v1182 = vld [vmem:[#allocation14 + $0x6dc] sm:$0xf]
    %v1183 = vld [vmem:[#allocation14 + $0x6e0] sm:$0xff]
    %v1184 = vld [vmem:[#allocation14 + $0x6e8] sm:$0xff]
    %v1185 = vld [vmem:[#allocation14 + $0x6f0] sm:$0xff]
    %v1186 = vld [vmem:[#allocation14 + $0x6f8] sm:$0xff]
    %v1187 = vld [vmem:[#allocation14 + $0x700] sm:$0xff]
    %v1188 = vld [vmem:[#allocation14 + $0x708] sm:$0xf]
    %v1189 = vld [vmem:[#allocation14 + $0x70c] sm:$0xff]
    %v1190 = vld [vmem:[#allocation14 + $0x714] sm:$0xff]
    %v1191 = vld [vmem:[#allocation14 + $0x71c] sm:$0xff]
    %v1192 = vld [vmem:[#allocation14 + $0x724] sm:$0xff]
    %v1193 = vld [vmem:[#allocation14 + $0x72c] sm:$0xff]
    %v1194 = vld [vmem:[#allocation14 + $0x734] sm:$0xf]
    %v1195 = vld [vmem:[#allocation14 + $0x738] sm:$0xff]
    %v1196 = vld [vmem:[#allocation14 + $0x740] sm:$0xff]
    %v1197 = vld [vmem:[#allocation14 + $0x748] sm:$0xff]
    %v1198 = vld [vmem:[#allocation14 + $0x750] sm:$0xff]
    %v1199 = vld [vmem:[#allocation14 + $0x758] sm:$0xff]
    %v1200 = vld [vmem:[#allocation14 + $0x760] sm:$0xf]
    %v1201 = vld [vmem:[#allocation14 + $0x764] sm:$0xff]
    %v1202 = vld [vmem:[#allocation14 + $0x76c] sm:$0xff]
    %v1203 = vld [vmem:[#allocation14 + $0x774] sm:$0xff]
    %v1204 = vld [vmem:[#allocation14 + $0x77c] sm:$0xff]
    %v1205 = vld [vmem:[#allocation14 + $0x784] sm:$0xff]
    %v1206 = vld [vmem:[#allocation14 + $0x78c] sm:$0xf]
    %v1207 = vld [vmem:[#allocation14 + $0x790] sm:$0xff]
    %v1208 = vld [vmem:[#allocation14 + $0x798] sm:$0xff]
    %v1209 = vld [vmem:[#allocation14 + $0x7a0] sm:$0xff]
    %v1210 = vld [vmem:[#allocation14 + $0x7a8] sm:$0xff]
    %v1211 = vld [vmem:[#allocation14 + $0x7b0] sm:$0xff]
    %v1212 = vld [vmem:[#allocation14 + $0x7b8] sm:$0xf]
    %v1213 = vld [vmem:[#allocation14 + $0x7bc] sm:$0xff]
    %v1214 = vld [vmem:[#allocation14 + $0x7c4] sm:$0xff]
    %v1215 = vld [vmem:[#allocation14 + $0x7cc] sm:$0xff]
    %v1216 = vld [vmem:[#allocation14 + $0x7d4] sm:$0xff]
    %v1217 = vld [vmem:[#allocation14 + $0x7dc] sm:$0xff]
    %v1218 = vld [vmem:[#allocation14 + $0x7e4] sm:$0xf]
    %v1219 = vld [vmem:[#allocation14 + $0x7e8] sm:$0xff]
    %v1220 = vld [vmem:[#allocation14 + $0x7f0] sm:$0xff]
    %v1221 = vld [vmem:[#allocation14 + $0x7f8] sm:$0xff]
    %v1222 = vld [vmem:[#allocation14 + $0x800] sm:$0xff]
    %v1223 = vld [vmem:[#allocation14 + $0x808] sm:$0xff]
    %v1224 = vld [vmem:[#allocation14 + $0x810] sm:$0xf]
    %v1225 = vld [vmem:[#allocation14 + $0x814] sm:$0xff]
    %v1226 = vld [vmem:[#allocation14 + $0x81c] sm:$0xff]
    %v1227 = vld [vmem:[#allocation14 + $0x824] sm:$0xff]
    %v1228 = vld [vmem:[#allocation14 + $0x82c] sm:$0xff]
    %v1229 = vld [vmem:[#allocation14 + $0x834] sm:$0xff]
    %v1230 = vld [vmem:[#allocation14 + $0x83c] sm:$0xf]
    %v1231 = vld [vmem:[#allocation14 + $0x840] sm:$0xff]
    %v1232 = vld [vmem:[#allocation14 + $0x848] sm:$0xff]
    %v1233 = vld [vmem:[#allocation14 + $0x850] sm:$0xff]
    %v1234 = vld [vmem:[#allocation14 + $0x858] sm:$0xff]
    %v1235 = vld [vmem:[#allocation14 + $0x860] sm:$0xff]
    %v1236 = vld [vmem:[#allocation14 + $0x868] sm:$0xf]
    %v1237 = vld [vmem:[#allocation14 + $0x86c] sm:$0xff]
    %v1238 = vld [vmem:[#allocation14 + $0x874] sm:$0xff]
    %v1239 = vld [vmem:[#allocation14 + $0x87c] sm:$0xff]
    %v1240 = vld [vmem:[#allocation14 + $0x884] sm:$0xff]
    %v1241 = vld [vmem:[#allocation14 + $0x88c] sm:$0xff]
    %v1242 = vld [vmem:[#allocation14 + $0x894] sm:$0xf]
    %v1243 = vld [vmem:[#allocation16] sm:$0xff]
    %v1244 = vld [vmem:[#allocation16 + $0x8] sm:$0x7]
    %v1247 = vlaneseq
    %v1248 = vshrl.u32 %v1247, 7
    %v1249 = vsub.s32 0, %v1248
    %v1250 = vrot.slane %v1243, %v1249
    %v1251 = vlaneseq
    %v1252 = vshrl.u32 %v1251, 7
    %v1253 = vsub.s32 1, %v1252
    %v1254 = vrot.slane %v1243, %v1253
    %v1255 = vlaneseq
    %v1256 = vshrl.u32 %v1255, 7
    %v1257 = vsub.s32 2, %v1256
    %v1258 = vrot.slane %v1243, %v1257
    %v1259 = vlaneseq
    %v1260 = vshrl.u32 %v1259, 7
    %v1261 = vsub.s32 3, %v1260
    %v1262 = vrot.slane %v1243, %v1261
    %v1263 = vlaneseq
    %v1264 = vshrl.u32 %v1263, 7
    %v1265 = vsub.s32 4, %v1264
    %v1266 = vrot.slane %v1243, %v1265
    %v1267 = vlaneseq
    %v1268 = vshrl.u32 %v1267, 7
    %v1269 = vsub.s32 5, %v1268
    %v1270 = vrot.slane %v1243, %v1269
    %v1271 = vlaneseq
    %v1272 = vshrl.u32 %v1271, 7
    %v1273 = vsub.s32 6, %v1272
    %v1274 = vrot.slane %v1243, %v1273
    %v1275 = vlaneseq
    %v1276 = vshrl.u32 %v1275, 7
    %v1277 = vsub.s32 7, %v1276
    %v1278 = vrot.slane %v1243, %v1277
    %v1279 = vlaneseq
    %v1280 = vshrl.u32 %v1279, 7
    %v1281 = vsub.s32 0, %v1280
    %v1282 = vrot.slane %v1244, %v1281
    %v1283 = vlaneseq
    %v1284 = vshrl.u32 %v1283, 7
    %v1285 = vsub.s32 1, %v1284
    %v1286 = vrot.slane %v1244, %v1285
    %v1287 = vlaneseq
    %v1288 = vshrl.u32 %v1287, 7
    %v1289 = vsub.s32 2, %v1288
    %v1290 = vrot.slane %v1244, %v1289
    %v1602 = vunpack.c.l.b16 %v943
    %v1603 = vunpack.c.h.b16 %v943
    %v1604 = vunpack.c.l.b16 %v944
    %v1605 = vunpack.c.h.b16 %v944
    %v1606 = vunpack.c.l.b16 %v945
    %v1607 = vunpack.c.h.b16 %v945
    %v1608 = vunpack.c.l.b16 %v946
    %v1609 = vunpack.c.h.b16 %v946
    %v1610 = vunpack.c.l.b16 %v947
    %v1611 = vunpack.c.h.b16 %v947
    %v1612 = vunpack.c.l.b16 %v948
    %v1613 = vunpack.c.l.b16 %v949
    %v1614 = vunpack.c.h.b16 %v949
    %v1615 = vunpack.c.l.b16 %v950
    %v1616 = vunpack.c.h.b16 %v950
    %v1617 = vunpack.c.l.b16 %v951
    %v1618 = vunpack.c.h.b16 %v951
    %v1619 = vunpack.c.l.b16 %v952
    %v1620 = vunpack.c.h.b16 %v952
    %v1621 = vunpack.c.l.b16 %v953
    %v1622 = vunpack.c.h.b16 %v953
    %v1623 = vunpack.c.l.b16 %v954
    %v1624 = vunpack.c.l.b16 %v955
    %v1625 = vunpack.c.h.b16 %v955
    %v1626 = vunpack.c.l.b16 %v956
    %v1627 = vunpack.c.h.b16 %v956
    %v1628 = vunpack.c.l.b16 %v957
    %v1629 = vunpack.c.h.b16 %v957
    %v1630 = vunpack.c.l.b16 %v958
    %v1631 = vunpack.c.h.b16 %v958
    %v1632 = vunpack.c.l.b16 %v959
    %v1633 = vunpack.c.h.b16 %v959
    %v1634 = vunpack.c.l.b16 %v960
    %v1635 = vunpack.c.l.b16 %v961
    %v1636 = vunpack.c.h.b16 %v961
    %v1637 = vunpack.c.l.b16 %v962
    %v1638 = vunpack.c.h.b16 %v962
    %v1639 = vunpack.c.l.b16 %v963
    %v1640 = vunpack.c.h.b16 %v963
    %v1641 = vunpack.c.l.b16 %v964
    %v1642 = vunpack.c.h.b16 %v964
    %v1643 = vunpack.c.l.b16 %v965
    %v1644 = vunpack.c.h.b16 %v965
    %v1645 = vunpack.c.l.b16 %v966
    %v1646 = vunpack.c.l.b16 %v967
    %v1647 = vunpack.c.h.b16 %v967
    %v1648 = vunpack.c.l.b16 %v968
    %v1649 = vunpack.c.h.b16 %v968
    %v1650 = vunpack.c.l.b16 %v969
    %v1651 = vunpack.c.h.b16 %v969
    %v1652 = vunpack.c.l.b16 %v970
    %v1653 = vunpack.c.h.b16 %v970
    %v1654 = vunpack.c.l.b16 %v971
    %v1655 = vunpack.c.h.b16 %v971
    %v1656 = vunpack.c.l.b16 %v972
    %v1657 = vunpack.c.l.b16 %v973
    %v1658 = vunpack.c.h.b16 %v973
    %v1659 = vunpack.c.l.b16 %v974
    %v1660 = vunpack.c.h.b16 %v974
    %v1661 = vunpack.c.l.b16 %v975
    %v1662 = vunpack.c.h.b16 %v975
    %v1663 = vunpack.c.l.b16 %v976
    %v1664 = vunpack.c.h.b16 %v976
    %v1665 = vunpack.c.l.b16 %v977
    %v1666 = vunpack.c.h.b16 %v977
    %v1667 = vunpack.c.l.b16 %v978
    %v1668 = vunpack.c.l.b16 %v979
    %v1669 = vunpack.c.h.b16 %v979
    %v1670 = vunpack.c.l.b16 %v980
    %v1671 = vunpack.c.h.b16 %v980
    %v1672 = vunpack.c.l.b16 %v981
    %v1673 = vunpack.c.h.b16 %v981
    %v1674 = vunpack.c.l.b16 %v982
    %v1675 = vunpack.c.h.b16 %v982
    %v1676 = vunpack.c.l.b16 %v983
    %v1677 = vunpack.c.h.b16 %v983
    %v1678 = vunpack.c.l.b16 %v984
    %v1679 = vunpack.c.l.b16 %v985
    %v1680 = vunpack.c.h.b16 %v985
    %v1681 = vunpack.c.l.b16 %v986
    %v1682 = vunpack.c.h.b16 %v986
    %v1683 = vunpack.c.l.b16 %v987
    %v1684 = vunpack.c.h.b16 %v987
    %v1685 = vunpack.c.l.b16 %v988
    %v1686 = vunpack.c.h.b16 %v988
    %v1687 = vunpack.c.l.b16 %v989
    %v1688 = vunpack.c.h.b16 %v989
    %v1689 = vunpack.c.l.b16 %v990
    %v1690 = vunpack.c.l.b16 %v991
    %v1691 = vunpack.c.h.b16 %v991
    %v1692 = vunpack.c.l.b16 %v992
    %v1693 = vunpack.c.h.b16 %v992
    %v1694 = vunpack.c.l.b16 %v993
    %v1695 = vunpack.c.h.b16 %v993
    %v1696 = vunpack.c.l.b16 %v994
    %v1697 = vunpack.c.h.b16 %v994
    %v1698 = vunpack.c.l.b16 %v995
    %v1699 = vunpack.c.h.b16 %v995
    %v1700 = vunpack.c.l.b16 %v996
    %v1701 = vunpack.c.l.b16 %v997
    %v1702 = vunpack.c.h.b16 %v997
    %v1703 = vunpack.c.l.b16 %v998
    %v1704 = vunpack.c.h.b16 %v998
    %v1705 = vunpack.c.l.b16 %v999
    %v1706 = vunpack.c.h.b16 %v999
    %v1707 = vunpack.c.l.b16 %v1000
    %v1708 = vunpack.c.h.b16 %v1000
    %v1709 = vunpack.c.l.b16 %v1001
    %v1710 = vunpack.c.h.b16 %v1001
    %v1711 = vunpack.c.l.b16 %v1002
    %v1712 = vunpack.c.l.b16 %v1003
    %v1713 = vunpack.c.h.b16 %v1003
    %v1714 = vunpack.c.l.b16 %v1004
    %v1715 = vunpack.c.h.b16 %v1004
    %v1716 = vunpack.c.l.b16 %v1005
    %v1717 = vunpack.c.h.b16 %v1005
    %v1718 = vunpack.c.l.b16 %v1006
    %v1719 = vunpack.c.h.b16 %v1006
    %v1720 = vunpack.c.l.b16 %v1007
    %v1721 = vunpack.c.h.b16 %v1007
    %v1722 = vunpack.c.l.b16 %v1008
    %v1723 = vunpack.c.l.b16 %v1009
    %v1724 = vunpack.c.h.b16 %v1009
    %v1725 = vunpack.c.l.b16 %v1010
    %v1726 = vunpack.c.h.b16 %v1010
    %v1727 = vunpack.c.l.b16 %v1011
    %v1728 = vunpack.c.h.b16 %v1011
    %v1729 = vunpack.c.l.b16 %v1012
    %v1730 = vunpack.c.h.b16 %v1012
    %v1731 = vunpack.c.l.b16 %v1013
    %v1732 = vunpack.c.h.b16 %v1013
    %v1733 = vunpack.c.l.b16 %v1014
    %v1734 = vunpack.c.l.b16 %v1015
    %v1735 = vunpack.c.h.b16 %v1015
    %v1736 = vunpack.c.l.b16 %v1016
    %v1737 = vunpack.c.h.b16 %v1016
    %v1738 = vunpack.c.l.b16 %v1017
    %v1739 = vunpack.c.h.b16 %v1017
    %v1740 = vunpack.c.l.b16 %v1018
    %v1741 = vunpack.c.h.b16 %v1018
    %v1742 = vunpack.c.l.b16 %v1019
    %v1743 = vunpack.c.h.b16 %v1019
    %v1744 = vunpack.c.l.b16 %v1020
    %v1745 = vunpack.c.l.b16 %v1021
    %v1746 = vunpack.c.h.b16 %v1021
    %v1747 = vunpack.c.l.b16 %v1022
    %v1748 = vunpack.c.h.b16 %v1022
    %v1749 = vunpack.c.l.b16 %v1023
    %v1750 = vunpack.c.h.b16 %v1023
    %v1751 = vunpack.c.l.b16 %v1024
    %v1752 = vunpack.c.h.b16 %v1024
    %v1753 = vunpack.c.l.b16 %v1025
    %v1754 = vunpack.c.h.b16 %v1025
    %v1755 = vunpack.c.l.b16 %v1026
    %v1756 = vunpack.c.l.b16 %v1027
    %v1757 = vunpack.c.h.b16 %v1027
    %v1758 = vunpack.c.l.b16 %v1028
    %v1759 = vunpack.c.h.b16 %v1028
    %v1760 = vunpack.c.l.b16 %v1029
    %v1761 = vunpack.c.h.b16 %v1029
    %v1762 = vunpack.c.l.b16 %v1030
    %v1763 = vunpack.c.h.b16 %v1030
    %v1764 = vunpack.c.l.b16 %v1031
    %v1765 = vunpack.c.h.b16 %v1031
    %v1766 = vunpack.c.l.b16 %v1032
    %v1767 = vunpack.c.l.b16 %v1033
    %v1768 = vunpack.c.h.b16 %v1033
    %v1769 = vunpack.c.l.b16 %v1034
    %v1770 = vunpack.c.h.b16 %v1034
    %v1771 = vunpack.c.l.b16 %v1035
    %v1772 = vunpack.c.h.b16 %v1035
    %v1773 = vunpack.c.l.b16 %v1036
    %v1774 = vunpack.c.h.b16 %v1036
    %v1775 = vunpack.c.l.b16 %v1037
    %v1776 = vunpack.c.h.b16 %v1037
    %v1777 = vunpack.c.l.b16 %v1038
    %v1778 = vunpack.c.l.b16 %v1039
    %v1779 = vunpack.c.h.b16 %v1039
    %v1780 = vunpack.c.l.b16 %v1040
    %v1781 = vunpack.c.h.b16 %v1040
    %v1782 = vunpack.c.l.b16 %v1041
    %v1783 = vunpack.c.h.b16 %v1041
    %v1784 = vunpack.c.l.b16 %v1042
    %v1785 = vunpack.c.h.b16 %v1042
    %v1786 = vunpack.c.l.b16 %v1043
    %v1787 = vunpack.c.h.b16 %v1043
    %v1788 = vunpack.c.l.b16 %v1044
    %v1789 = vunpack.c.l.b16 %v1045
    %v1790 = vunpack.c.h.b16 %v1045
    %v1791 = vunpack.c.l.b16 %v1046
    %v1792 = vunpack.c.h.b16 %v1046
    %v1793 = vunpack.c.l.b16 %v1047
    %v1794 = vunpack.c.h.b16 %v1047
    %v1795 = vunpack.c.l.b16 %v1048
    %v1796 = vunpack.c.h.b16 %v1048
    %v1797 = vunpack.c.l.b16 %v1049
    %v1798 = vunpack.c.h.b16 %v1049
    %v1799 = vunpack.c.l.b16 %v1050
    %v1800 = vunpack.c.l.b16 %v1051
    %v1801 = vunpack.c.h.b16 %v1051
    %v1802 = vunpack.c.l.b16 %v1052
    %v1803 = vunpack.c.h.b16 %v1052
    %v1804 = vunpack.c.l.b16 %v1053
    %v1805 = vunpack.c.h.b16 %v1053
    %v1806 = vunpack.c.l.b16 %v1054
    %v1807 = vunpack.c.h.b16 %v1054
    %v1808 = vunpack.c.l.b16 %v1055
    %v1809 = vunpack.c.h.b16 %v1055
    %v1810 = vunpack.c.l.b16 %v1056
    %v1811 = vunpack.c.l.b16 %v1057
    %v1812 = vunpack.c.h.b16 %v1057
    %v1813 = vunpack.c.l.b16 %v1058
    %v1814 = vunpack.c.h.b16 %v1058
    %v1815 = vunpack.c.l.b16 %v1059
    %v1816 = vunpack.c.h.b16 %v1059
    %v1817 = vunpack.c.l.b16 %v1060
    %v1818 = vunpack.c.h.b16 %v1060
    %v1819 = vunpack.c.l.b16 %v1061
    %v1820 = vunpack.c.h.b16 %v1061
    %v1821 = vunpack.c.l.b16 %v1062
    %v1822 = vunpack.c.l.b16 %v1063
    %v1823 = vunpack.c.h.b16 %v1063
    %v1824 = vunpack.c.l.b16 %v1064
    %v1825 = vunpack.c.h.b16 %v1064
    %v1826 = vunpack.c.l.b16 %v1065
    %v1827 = vunpack.c.h.b16 %v1065
    %v1828 = vunpack.c.l.b16 %v1066
    %v1829 = vunpack.c.h.b16 %v1066
    %v1830 = vunpack.c.l.b16 %v1067
    %v1831 = vunpack.c.h.b16 %v1067
    %v1832 = vunpack.c.l.b16 %v1068
    %v1833 = vunpack.c.l.b16 %v1069
    %v1834 = vunpack.c.h.b16 %v1069
    %v1835 = vunpack.c.l.b16 %v1070
    %v1836 = vunpack.c.h.b16 %v1070
    %v1837 = vunpack.c.l.b16 %v1071
    %v1838 = vunpack.c.h.b16 %v1071
    %v1839 = vunpack.c.l.b16 %v1072
    %v1840 = vunpack.c.h.b16 %v1072
    %v1841 = vunpack.c.l.b16 %v1073
    %v1842 = vunpack.c.h.b16 %v1073
    %v1843 = vunpack.c.l.b16 %v1074
    %v1844 = vunpack.c.l.b16 %v1075
    %v1845 = vunpack.c.h.b16 %v1075
    %v1846 = vunpack.c.l.b16 %v1076
    %v1847 = vunpack.c.h.b16 %v1076
    %v1848 = vunpack.c.l.b16 %v1077
    %v1849 = vunpack.c.h.b16 %v1077
    %v1850 = vunpack.c.l.b16 %v1078
    %v1851 = vunpack.c.h.b16 %v1078
    %v1852 = vunpack.c.l.b16 %v1079
    %v1853 = vunpack.c.h.b16 %v1079
    %v1854 = vunpack.c.l.b16 %v1080
    %v1855 = vunpack.c.l.b16 %v1081
    %v1856 = vunpack.c.h.b16 %v1081
    %v1857 = vunpack.c.l.b16 %v1082
    %v1858 = vunpack.c.h.b16 %v1082
    %v1859 = vunpack.c.l.b16 %v1083
    %v1860 = vunpack.c.h.b16 %v1083
    %v1861 = vunpack.c.l.b16 %v1084
    %v1862 = vunpack.c.h.b16 %v1084
    %v1863 = vunpack.c.l.b16 %v1085
    %v1864 = vunpack.c.h.b16 %v1085
    %v1865 = vunpack.c.l.b16 %v1086
    %v1866 = vunpack.c.l.b16 %v1087
    %v1867 = vunpack.c.h.b16 %v1087
    %v1868 = vunpack.c.l.b16 %v1088
    %v1869 = vunpack.c.h.b16 %v1088
    %v1870 = vunpack.c.l.b16 %v1089
    %v1871 = vunpack.c.h.b16 %v1089
    %v1872 = vunpack.c.l.b16 %v1090
    %v1873 = vunpack.c.h.b16 %v1090
    %v1874 = vunpack.c.l.b16 %v1091
    %v1875 = vunpack.c.h.b16 %v1091
    %v1876 = vunpack.c.l.b16 %v1092
    %v1877 = vunpack.c.l.b16 %v1093
    %v1878 = vunpack.c.h.b16 %v1093
    %v1879 = vunpack.c.l.b16 %v1094
    %v1880 = vunpack.c.h.b16 %v1094
    %v1881 = vunpack.c.l.b16 %v1095
    %v1882 = vunpack.c.h.b16 %v1095
    %v1883 = vunpack.c.l.b16 %v1096
    %v1884 = vunpack.c.h.b16 %v1096
    %v1885 = vunpack.c.l.b16 %v1097
    %v1886 = vunpack.c.h.b16 %v1097
    %v1887 = vunpack.c.l.b16 %v1098
    %v1888 = vunpack.c.l.b16 %v1099
    %v1889 = vunpack.c.h.b16 %v1099
    %v1890 = vunpack.c.l.b16 %v1100
    %v1891 = vunpack.c.h.b16 %v1100
    %v1892 = vunpack.c.l.b16 %v1101
    %v1893 = vunpack.c.h.b16 %v1101
    %v1894 = vunpack.c.l.b16 %v1102
    %v1895 = vunpack.c.h.b16 %v1102
    %v1896 = vunpack.c.l.b16 %v1103
    %v1897 = vunpack.c.h.b16 %v1103
    %v1898 = vunpack.c.l.b16 %v1104
    %v1899 = vunpack.c.l.b16 %v1105
    %v1900 = vunpack.c.h.b16 %v1105
    %v1901 = vunpack.c.l.b16 %v1106
    %v1902 = vunpack.c.h.b16 %v1106
    %v1903 = vunpack.c.l.b16 %v1107
    %v1904 = vunpack.c.h.b16 %v1107
    %v1905 = vunpack.c.l.b16 %v1108
    %v1906 = vunpack.c.h.b16 %v1108
    %v1907 = vunpack.c.l.b16 %v1109
    %v1908 = vunpack.c.h.b16 %v1109
    %v1909 = vunpack.c.l.b16 %v1110
    %v1910 = vunpack.c.l.b16 %v1111
    %v1911 = vunpack.c.h.b16 %v1111
    %v1912 = vunpack.c.l.b16 %v1112
    %v1913 = vunpack.c.h.b16 %v1112
    %v1914 = vunpack.c.l.b16 %v1113
    %v1915 = vunpack.c.h.b16 %v1113
    %v1916 = vunpack.c.l.b16 %v1114
    %v1917 = vunpack.c.h.b16 %v1114
    %v1918 = vunpack.c.l.b16 %v1115
    %v1919 = vunpack.c.h.b16 %v1115
    %v1920 = vunpack.c.l.b16 %v1116
    %v1921 = vunpack.c.l.b16 %v1117
    %v1922 = vunpack.c.h.b16 %v1117
    %v1923 = vunpack.c.l.b16 %v1118
    %v1924 = vunpack.c.h.b16 %v1118
    %v1925 = vunpack.c.l.b16 %v1119
    %v1926 = vunpack.c.h.b16 %v1119
    %v1927 = vunpack.c.l.b16 %v1120
    %v1928 = vunpack.c.h.b16 %v1120
    %v1929 = vunpack.c.l.b16 %v1121
    %v1930 = vunpack.c.h.b16 %v1121
    %v1931 = vunpack.c.l.b16 %v1122
    %v1932 = vunpack.c.l.b16 %v1123
    %v1933 = vunpack.c.h.b16 %v1123
    %v1934 = vunpack.c.l.b16 %v1124
    %v1935 = vunpack.c.h.b16 %v1124
    %v1936 = vunpack.c.l.b16 %v1125
    %v1937 = vunpack.c.h.b16 %v1125
    %v1938 = vunpack.c.l.b16 %v1126
    %v1939 = vunpack.c.h.b16 %v1126
    %v1940 = vunpack.c.l.b16 %v1127
    %v1941 = vunpack.c.h.b16 %v1127
    %v1942 = vunpack.c.l.b16 %v1128
    %v1943 = vunpack.c.l.b16 %v1129
    %v1944 = vunpack.c.h.b16 %v1129
    %v1945 = vunpack.c.l.b16 %v1130
    %v1946 = vunpack.c.h.b16 %v1130
    %v1947 = vunpack.c.l.b16 %v1131
    %v1948 = vunpack.c.h.b16 %v1131
    %v1949 = vunpack.c.l.b16 %v1132
    %v1950 = vunpack.c.h.b16 %v1132
    %v1951 = vunpack.c.l.b16 %v1133
    %v1952 = vunpack.c.h.b16 %v1133
    %v1953 = vunpack.c.l.b16 %v1134
    %v1954 = vunpack.c.l.b16 %v1135
    %v1955 = vunpack.c.h.b16 %v1135
    %v1956 = vunpack.c.l.b16 %v1136
    %v1957 = vunpack.c.h.b16 %v1136
    %v1958 = vunpack.c.l.b16 %v1137
    %v1959 = vunpack.c.h.b16 %v1137
    %v1960 = vunpack.c.l.b16 %v1138
    %v1961 = vunpack.c.h.b16 %v1138
    %v1962 = vunpack.c.l.b16 %v1139
    %v1963 = vunpack.c.h.b16 %v1139
    %v1964 = vunpack.c.l.b16 %v1140
    %v1965 = vunpack.c.l.b16 %v1141
    %v1966 = vunpack.c.h.b16 %v1141
    %v1967 = vunpack.c.l.b16 %v1142
    %v1968 = vunpack.c.h.b16 %v1142
    %v1969 = vunpack.c.l.b16 %v1143
    %v1970 = vunpack.c.h.b16 %v1143
    %v1971 = vunpack.c.l.b16 %v1144
    %v1972 = vunpack.c.h.b16 %v1144
    %v1973 = vunpack.c.l.b16 %v1145
    %v1974 = vunpack.c.h.b16 %v1145
    %v1975 = vunpack.c.l.b16 %v1146
    %v1976 = vunpack.c.l.b16 %v1147
    %v1977 = vunpack.c.h.b16 %v1147
    %v1978 = vunpack.c.l.b16 %v1148
    %v1979 = vunpack.c.h.b16 %v1148
    %v1980 = vunpack.c.l.b16 %v1149
    %v1981 = vunpack.c.h.b16 %v1149
    %v1982 = vunpack.c.l.b16 %v1150
    %v1983 = vunpack.c.h.b16 %v1150
    %v1984 = vunpack.c.l.b16 %v1151
    %v1985 = vunpack.c.h.b16 %v1151
    %v1986 = vunpack.c.l.b16 %v1152
    %v1987 = vunpack.c.l.b16 %v1153
    %v1988 = vunpack.c.h.b16 %v1153
    %v1989 = vunpack.c.l.b16 %v1154
    %v1990 = vunpack.c.h.b16 %v1154
    %v1991 = vunpack.c.l.b16 %v1155
    %v1992 = vunpack.c.h.b16 %v1155
    %v1993 = vunpack.c.l.b16 %v1156
    %v1994 = vunpack.c.h.b16 %v1156
    %v1995 = vunpack.c.l.b16 %v1157
    %v1996 = vunpack.c.h.b16 %v1157
    %v1997 = vunpack.c.l.b16 %v1158
    %v1998 = vunpack.c.l.b16 %v1159
    %v1999 = vunpack.c.h.b16 %v1159
    %v2000 = vunpack.c.l.b16 %v1160
    %v2001 = vunpack.c.h.b16 %v1160
    %v2002 = vunpack.c.l.b16 %v1161
    %v2003 = vunpack.c.h.b16 %v1161
    %v2004 = vunpack.c.l.b16 %v1162
    %v2005 = vunpack.c.h.b16 %v1162
    %v2006 = vunpack.c.l.b16 %v1163
    %v2007 = vunpack.c.h.b16 %v1163
    %v2008 = vunpack.c.l.b16 %v1164
    %v2009 = vunpack.c.l.b16 %v1165
    %v2010 = vunpack.c.h.b16 %v1165
    %v2011 = vunpack.c.l.b16 %v1166
    %v2012 = vunpack.c.h.b16 %v1166
    %v2013 = vunpack.c.l.b16 %v1167
    %v2014 = vunpack.c.h.b16 %v1167
    %v2015 = vunpack.c.l.b16 %v1168
    %v2016 = vunpack.c.h.b16 %v1168
    %v2017 = vunpack.c.l.b16 %v1169
    %v2018 = vunpack.c.h.b16 %v1169
    %v2019 = vunpack.c.l.b16 %v1170
    %v2020 = vunpack.c.l.b16 %v1171
    %v2021 = vunpack.c.h.b16 %v1171
    %v2022 = vunpack.c.l.b16 %v1172
    %v2023 = vunpack.c.h.b16 %v1172
    %v2024 = vunpack.c.l.b16 %v1173
    %v2025 = vunpack.c.h.b16 %v1173
    %v2026 = vunpack.c.l.b16 %v1174
    %v2027 = vunpack.c.h.b16 %v1174
    %v2028 = vunpack.c.l.b16 %v1175
    %v2029 = vunpack.c.h.b16 %v1175
    %v2030 = vunpack.c.l.b16 %v1176
    %v2031 = vunpack.c.l.b16 %v1177
    %v2032 = vunpack.c.h.b16 %v1177
    %v2033 = vunpack.c.l.b16 %v1178
    %v2034 = vunpack.c.h.b16 %v1178
    %v2035 = vunpack.c.l.b16 %v1179
    %v2036 = vunpack.c.h.b16 %v1179
    %v2037 = vunpack.c.l.b16 %v1180
    %v2038 = vunpack.c.h.b16 %v1180
    %v2039 = vunpack.c.l.b16 %v1181
    %v2040 = vunpack.c.h.b16 %v1181
    %v2041 = vunpack.c.l.b16 %v1182
    %v2042 = vunpack.c.l.b16 %v1183
    %v2043 = vunpack.c.h.b16 %v1183
    %v2044 = vunpack.c.l.b16 %v1184
    %v2045 = vunpack.c.h.b16 %v1184
    %v2046 = vunpack.c.l.b16 %v1185
    %v2047 = vunpack.c.h.b16 %v1185
    %v2048 = vunpack.c.l.b16 %v1186
    %v2049 = vunpack.c.h.b16 %v1186
    %v2050 = vunpack.c.l.b16 %v1187
    %v2051 = vunpack.c.h.b16 %v1187
    %v2052 = vunpack.c.l.b16 %v1188
    %v2053 = vunpack.c.l.b16 %v1189
    %v2054 = vunpack.c.h.b16 %v1189
    %v2055 = vunpack.c.l.b16 %v1190
    %v2056 = vunpack.c.h.b16 %v1190
    %v2057 = vunpack.c.l.b16 %v1191
    %v2058 = vunpack.c.h.b16 %v1191
    %v2059 = vunpack.c.l.b16 %v1192
    %v2060 = vunpack.c.h.b16 %v1192
    %v2061 = vunpack.c.l.b16 %v1193
    %v2062 = vunpack.c.h.b16 %v1193
    %v2063 = vunpack.c.l.b16 %v1194
    %v2064 = vunpack.c.l.b16 %v1195
    %v2065 = vunpack.c.h.b16 %v1195
    %v2066 = vunpack.c.l.b16 %v1196
    %v2067 = vunpack.c.h.b16 %v1196
    %v2068 = vunpack.c.l.b16 %v1197
    %v2069 = vunpack.c.h.b16 %v1197
    %v2070 = vunpack.c.l.b16 %v1198
    %v2071 = vunpack.c.h.b16 %v1198
    %v2072 = vunpack.c.l.b16 %v1199
    %v2073 = vunpack.c.h.b16 %v1199
    %v2074 = vunpack.c.l.b16 %v1200
    %v2075 = vunpack.c.l.b16 %v1201
    %v2076 = vunpack.c.h.b16 %v1201
    %v2077 = vunpack.c.l.b16 %v1202
    %v2078 = vunpack.c.h.b16 %v1202
    %v2079 = vunpack.c.l.b16 %v1203
    %v2080 = vunpack.c.h.b16 %v1203
    %v2081 = vunpack.c.l.b16 %v1204
    %v2082 = vunpack.c.h.b16 %v1204
    %v2083 = vunpack.c.l.b16 %v1205
    %v2084 = vunpack.c.h.b16 %v1205
    %v2085 = vunpack.c.l.b16 %v1206
    %v2086 = vunpack.c.l.b16 %v1207
    %v2087 = vunpack.c.h.b16 %v1207
    %v2088 = vunpack.c.l.b16 %v1208
    %v2089 = vunpack.c.h.b16 %v1208
    %v2090 = vunpack.c.l.b16 %v1209
    %v2091 = vunpack.c.h.b16 %v1209
    %v2092 = vunpack.c.l.b16 %v1210
    %v2093 = vunpack.c.h.b16 %v1210
    %v2094 = vunpack.c.l.b16 %v1211
    %v2095 = vunpack.c.h.b16 %v1211
    %v2096 = vunpack.c.l.b16 %v1212
    %v2097 = vunpack.c.l.b16 %v1213
    %v2098 = vunpack.c.h.b16 %v1213
    %v2099 = vunpack.c.l.b16 %v1214
    %v2100 = vunpack.c.h.b16 %v1214
    %v2101 = vunpack.c.l.b16 %v1215
    %v2102 = vunpack.c.h.b16 %v1215
    %v2103 = vunpack.c.l.b16 %v1216
    %v2104 = vunpack.c.h.b16 %v1216
    %v2105 = vunpack.c.l.b16 %v1217
    %v2106 = vunpack.c.h.b16 %v1217
    %v2107 = vunpack.c.l.b16 %v1218
    %v2108 = vunpack.c.l.b16 %v1219
    %v2109 = vunpack.c.h.b16 %v1219
    %v2110 = vunpack.c.l.b16 %v1220
    %v2111 = vunpack.c.h.b16 %v1220
    %v2112 = vunpack.c.l.b16 %v1221
    %v2113 = vunpack.c.h.b16 %v1221
    %v2114 = vunpack.c.l.b16 %v1222
    %v2115 = vunpack.c.h.b16 %v1222
    %v2116 = vunpack.c.l.b16 %v1223
    %v2117 = vunpack.c.h.b16 %v1223
    %v2118 = vunpack.c.l.b16 %v1224
    %v2119 = vunpack.c.l.b16 %v1225
    %v2120 = vunpack.c.h.b16 %v1225
    %v2121 = vunpack.c.l.b16 %v1226
    %v2122 = vunpack.c.h.b16 %v1226
    %v2123 = vunpack.c.l.b16 %v1227
    %v2124 = vunpack.c.h.b16 %v1227
    %v2125 = vunpack.c.l.b16 %v1228
    %v2126 = vunpack.c.h.b16 %v1228
    %v2127 = vunpack.c.l.b16 %v1229
    %v2128 = vunpack.c.h.b16 %v1229
    %v2129 = vunpack.c.l.b16 %v1230
    %v2130 = vunpack.c.l.b16 %v1231
    %v2131 = vunpack.c.h.b16 %v1231
    %v2132 = vunpack.c.l.b16 %v1232
    %v2133 = vunpack.c.h.b16 %v1232
    %v2134 = vunpack.c.l.b16 %v1233
    %v2135 = vunpack.c.h.b16 %v1233
    %v2136 = vunpack.c.l.b16 %v1234
    %v2137 = vunpack.c.h.b16 %v1234
    %v2138 = vunpack.c.l.b16 %v1235
    %v2139 = vunpack.c.h.b16 %v1235
    %v2140 = vunpack.c.l.b16 %v1236
    %v2141 = vunpack.c.l.b16 %v1237
    %v2142 = vunpack.c.h.b16 %v1237
    %v2143 = vunpack.c.l.b16 %v1238
    %v2144 = vunpack.c.h.b16 %v1238
    %v2145 = vunpack.c.l.b16 %v1239
    %v2146 = vunpack.c.h.b16 %v1239
    %v2147 = vunpack.c.l.b16 %v1240
    %v2148 = vunpack.c.h.b16 %v1240
    %v2149 = vunpack.c.l.b16 %v1241
    %v2150 = vunpack.c.h.b16 %v1241
    %v2151 = vunpack.c.l.b16 %v1242
    %v2152 = vpack.c.b16 %v1613, %v1602
    %v2153 = vpack.c.b16 %v1614, %v1603
    %v2154 = vpack.c.b16 %v1615, %v1604
    %v2155 = vpack.c.b16 %v1616, %v1605
    %v2156 = vpack.c.b16 %v1617, %v1606
    %v2157 = vpack.c.b16 %v1618, %v1607
    %v2158 = vpack.c.b16 %v1619, %v1608
    %v2159 = vpack.c.b16 %v1620, %v1609
    %v2160 = vpack.c.b16 %v1621, %v1610
    %v2161 = vpack.c.b16 %v1622, %v1611
    %v2162 = vpack.c.b16 %v1623, %v1612
    %v2163 = vpack.c.b16 %v1635, %v1624
    %v2164 = vpack.c.b16 %v1636, %v1625
    %v2165 = vpack.c.b16 %v1637, %v1626
    %v2166 = vpack.c.b16 %v1638, %v1627
    %v2167 = vpack.c.b16 %v1639, %v1628
    %v2168 = vpack.c.b16 %v1640, %v1629
    %v2169 = vpack.c.b16 %v1641, %v1630
    %v2170 = vpack.c.b16 %v1642, %v1631
    %v2171 = vpack.c.b16 %v1643, %v1632
    %v2172 = vpack.c.b16 %v1644, %v1633
    %v2173 = vpack.c.b16 %v1645, %v1634
    %v2174 = vpack.c.b16 %v1657, %v1646
    %v2175 = vpack.c.b16 %v1658, %v1647
    %v2176 = vpack.c.b16 %v1659, %v1648
    %v2177 = vpack.c.b16 %v1660, %v1649
    %v2178 = vpack.c.b16 %v1661, %v1650
    %v2179 = vpack.c.b16 %v1662, %v1651
    %v2180 = vpack.c.b16 %v1663, %v1652
    %v2181 = vpack.c.b16 %v1664, %v1653
    %v2182 = vpack.c.b16 %v1665, %v1654
    %v2183 = vpack.c.b16 %v1666, %v1655
    %v2184 = vpack.c.b16 %v1667, %v1656
    %v2185 = vpack.c.b16 %v1679, %v1668
    %v2186 = vpack.c.b16 %v1680, %v1669
    %v2187 = vpack.c.b16 %v1681, %v1670
    %v2188 = vpack.c.b16 %v1682, %v1671
    %v2189 = vpack.c.b16 %v1683, %v1672
    %v2190 = vpack.c.b16 %v1684, %v1673
    %v2191 = vpack.c.b16 %v1685, %v1674
    %v2192 = vpack.c.b16 %v1686, %v1675
    %v2193 = vpack.c.b16 %v1687, %v1676
    %v2194 = vpack.c.b16 %v1688, %v1677
    %v2195 = vpack.c.b16 %v1689, %v1678
    %v2196 = vpack.c.b16 %v1701, %v1690
    %v2197 = vpack.c.b16 %v1702, %v1691
    %v2198 = vpack.c.b16 %v1703, %v1692
    %v2199 = vpack.c.b16 %v1704, %v1693
    %v2200 = vpack.c.b16 %v1705, %v1694
    %v2201 = vpack.c.b16 %v1706, %v1695
    %v2202 = vpack.c.b16 %v1707, %v1696
    %v2203 = vpack.c.b16 %v1708, %v1697
    %v2204 = vpack.c.b16 %v1709, %v1698
    %v2205 = vpack.c.b16 %v1710, %v1699
    %v2206 = vpack.c.b16 %v1711, %v1700
    %v2207 = vpack.c.b16 %v1723, %v1712
    %v2208 = vpack.c.b16 %v1724, %v1713
    %v2209 = vpack.c.b16 %v1725, %v1714
    %v2210 = vpack.c.b16 %v1726, %v1715
    %v2211 = vpack.c.b16 %v1727, %v1716
    %v2212 = vpack.c.b16 %v1728, %v1717
    %v2213 = vpack.c.b16 %v1729, %v1718
    %v2214 = vpack.c.b16 %v1730, %v1719
    %v2215 = vpack.c.b16 %v1731, %v1720
    %v2216 = vpack.c.b16 %v1732, %v1721
    %v2217 = vpack.c.b16 %v1733, %v1722
    %v2218 = vpack.c.b16 %v1745, %v1734
    %v2219 = vpack.c.b16 %v1746, %v1735
    %v2220 = vpack.c.b16 %v1747, %v1736
    %v2221 = vpack.c.b16 %v1748, %v1737
    %v2222 = vpack.c.b16 %v1749, %v1738
    %v2223 = vpack.c.b16 %v1750, %v1739
    %v2224 = vpack.c.b16 %v1751, %v1740
    %v2225 = vpack.c.b16 %v1752, %v1741
    %v2226 = vpack.c.b16 %v1753, %v1742
    %v2227 = vpack.c.b16 %v1754, %v1743
    %v2228 = vpack.c.b16 %v1755, %v1744
    %v2229 = vpack.c.b16 %v1767, %v1756
    %v2230 = vpack.c.b16 %v1768, %v1757
    %v2231 = vpack.c.b16 %v1769, %v1758
    %v2232 = vpack.c.b16 %v1770, %v1759
    %v2233 = vpack.c.b16 %v1771, %v1760
    %v2234 = vpack.c.b16 %v1772, %v1761
    %v2235 = vpack.c.b16 %v1773, %v1762
    %v2236 = vpack.c.b16 %v1774, %v1763
    %v2237 = vpack.c.b16 %v1775, %v1764
    %v2238 = vpack.c.b16 %v1776, %v1765
    %v2239 = vpack.c.b16 %v1777, %v1766
    %v2240 = vpack.c.b16 %v1789, %v1778
    %v2241 = vpack.c.b16 %v1790, %v1779
    %v2242 = vpack.c.b16 %v1791, %v1780
    %v2243 = vpack.c.b16 %v1792, %v1781
    %v2244 = vpack.c.b16 %v1793, %v1782
    %v2245 = vpack.c.b16 %v1794, %v1783
    %v2246 = vpack.c.b16 %v1795, %v1784
    %v2247 = vpack.c.b16 %v1796, %v1785
    %v2248 = vpack.c.b16 %v1797, %v1786
    %v2249 = vpack.c.b16 %v1798, %v1787
    %v2250 = vpack.c.b16 %v1799, %v1788
    %v2251 = vpack.c.b16 %v1811, %v1800
    %v2252 = vpack.c.b16 %v1812, %v1801
    %v2253 = vpack.c.b16 %v1813, %v1802
    %v2254 = vpack.c.b16 %v1814, %v1803
    %v2255 = vpack.c.b16 %v1815, %v1804
    %v2256 = vpack.c.b16 %v1816, %v1805
    %v2257 = vpack.c.b16 %v1817, %v1806
    %v2258 = vpack.c.b16 %v1818, %v1807
    %v2259 = vpack.c.b16 %v1819, %v1808
    %v2260 = vpack.c.b16 %v1820, %v1809
    %v2261 = vpack.c.b16 %v1821, %v1810
    %v2262 = vpack.c.b16 %v1833, %v1822
    %v2263 = vpack.c.b16 %v1834, %v1823
    %v2264 = vpack.c.b16 %v1835, %v1824
    %v2265 = vpack.c.b16 %v1836, %v1825
    %v2266 = vpack.c.b16 %v1837, %v1826
    %v2267 = vpack.c.b16 %v1838, %v1827
    %v2268 = vpack.c.b16 %v1839, %v1828
    %v2269 = vpack.c.b16 %v1840, %v1829
    %v2270 = vpack.c.b16 %v1841, %v1830
    %v2271 = vpack.c.b16 %v1842, %v1831
    %v2272 = vpack.c.b16 %v1843, %v1832
    %v2273 = vpack.c.b16 %v1855, %v1844
    %v2274 = vpack.c.b16 %v1856, %v1845
    %v2275 = vpack.c.b16 %v1857, %v1846
    %v2276 = vpack.c.b16 %v1858, %v1847
    %v2277 = vpack.c.b16 %v1859, %v1848
    %v2278 = vpack.c.b16 %v1860, %v1849
    %v2279 = vpack.c.b16 %v1861, %v1850
    %v2280 = vpack.c.b16 %v1862, %v1851
    %v2281 = vpack.c.b16 %v1863, %v1852
    %v2282 = vpack.c.b16 %v1864, %v1853
    %v2283 = vpack.c.b16 %v1865, %v1854
    %v2284 = vpack.c.b16 %v1877, %v1866
    %v2285 = vpack.c.b16 %v1878, %v1867
    %v2286 = vpack.c.b16 %v1879, %v1868
    %v2287 = vpack.c.b16 %v1880, %v1869
    %v2288 = vpack.c.b16 %v1881, %v1870
    %v2289 = vpack.c.b16 %v1882, %v1871
    %v2290 = vpack.c.b16 %v1883, %v1872
    %v2291 = vpack.c.b16 %v1884, %v1873
    %v2292 = vpack.c.b16 %v1885, %v1874
    %v2293 = vpack.c.b16 %v1886, %v1875
    %v2294 = vpack.c.b16 %v1887, %v1876
    %v2295 = vpack.c.b16 %v1899, %v1888
    %v2296 = vpack.c.b16 %v1900, %v1889
    %v2297 = vpack.c.b16 %v1901, %v1890
    %v2298 = vpack.c.b16 %v1902, %v1891
    %v2299 = vpack.c.b16 %v1903, %v1892
    %v2300 = vpack.c.b16 %v1904, %v1893
    %v2301 = vpack.c.b16 %v1905, %v1894
    %v2302 = vpack.c.b16 %v1906, %v1895
    %v2303 = vpack.c.b16 %v1907, %v1896
    %v2304 = vpack.c.b16 %v1908, %v1897
    %v2305 = vpack.c.b16 %v1909, %v1898
    %v2306 = vpack.c.b16 %v1921, %v1910
    %v2307 = vpack.c.b16 %v1922, %v1911
    %v2308 = vpack.c.b16 %v1923, %v1912
    %v2309 = vpack.c.b16 %v1924, %v1913
    %v2310 = vpack.c.b16 %v1925, %v1914
    %v2311 = vpack.c.b16 %v1926, %v1915
    %v2312 = vpack.c.b16 %v1927, %v1916
    %v2313 = vpack.c.b16 %v1928, %v1917
    %v2314 = vpack.c.b16 %v1929, %v1918
    %v2315 = vpack.c.b16 %v1930, %v1919
    %v2316 = vpack.c.b16 %v1931, %v1920
    %v2317 = vpack.c.b16 %v1943, %v1932
    %v2318 = vpack.c.b16 %v1944, %v1933
    %v2319 = vpack.c.b16 %v1945, %v1934
    %v2320 = vpack.c.b16 %v1946, %v1935
    %v2321 = vpack.c.b16 %v1947, %v1936
    %v2322 = vpack.c.b16 %v1948, %v1937
    %v2323 = vpack.c.b16 %v1949, %v1938
    %v2324 = vpack.c.b16 %v1950, %v1939
    %v2325 = vpack.c.b16 %v1951, %v1940
    %v2326 = vpack.c.b16 %v1952, %v1941
    %v2327 = vpack.c.b16 %v1953, %v1942
    %v2328 = vpack.c.b16 %v1965, %v1954
    %v2329 = vpack.c.b16 %v1966, %v1955
    %v2330 = vpack.c.b16 %v1967, %v1956
    %v2331 = vpack.c.b16 %v1968, %v1957
    %v2332 = vpack.c.b16 %v1969, %v1958
    %v2333 = vpack.c.b16 %v1970, %v1959
    %v2334 = vpack.c.b16 %v1971, %v1960
    %v2335 = vpack.c.b16 %v1972, %v1961
    %v2336 = vpack.c.b16 %v1973, %v1962
    %v2337 = vpack.c.b16 %v1974, %v1963
    %v2338 = vpack.c.b16 %v1975, %v1964
    %v2339 = vpack.c.b16 %v1987, %v1976
    %v2340 = vpack.c.b16 %v1988, %v1977
    %v2341 = vpack.c.b16 %v1989, %v1978
    %v2342 = vpack.c.b16 %v1990, %v1979
    %v2343 = vpack.c.b16 %v1991, %v1980
    %v2344 = vpack.c.b16 %v1992, %v1981
    %v2345 = vpack.c.b16 %v1993, %v1982
    %v2346 = vpack.c.b16 %v1994, %v1983
    %v2347 = vpack.c.b16 %v1995, %v1984
    %v2348 = vpack.c.b16 %v1996, %v1985
    %v2349 = vpack.c.b16 %v1997, %v1986
    %v2350 = vpack.c.b16 %v2009, %v1998
    %v2351 = vpack.c.b16 %v2010, %v1999
    %v2352 = vpack.c.b16 %v2011, %v2000
    %v2353 = vpack.c.b16 %v2012, %v2001
    %v2354 = vpack.c.b16 %v2013, %v2002
    %v2355 = vpack.c.b16 %v2014, %v2003
    %v2356 = vpack.c.b16 %v2015, %v2004
    %v2357 = vpack.c.b16 %v2016, %v2005
    %v2358 = vpack.c.b16 %v2017, %v2006
    %v2359 = vpack.c.b16 %v2018, %v2007
    %v2360 = vpack.c.b16 %v2019, %v2008
    %v2361 = vpack.c.b16 %v2031, %v2020
    %v2362 = vpack.c.b16 %v2032, %v2021
    %v2363 = vpack.c.b16 %v2033, %v2022
    %v2364 = vpack.c.b16 %v2034, %v2023
    %v2365 = vpack.c.b16 %v2035, %v2024
    %v2366 = vpack.c.b16 %v2036, %v2025
    %v2367 = vpack.c.b16 %v2037, %v2026
    %v2368 = vpack.c.b16 %v2038, %v2027
    %v2369 = vpack.c.b16 %v2039, %v2028
    %v2370 = vpack.c.b16 %v2040, %v2029
    %v2371 = vpack.c.b16 %v2041, %v2030
    %v2372 = vpack.c.b16 %v2053, %v2042
    %v2373 = vpack.c.b16 %v2054, %v2043
    %v2374 = vpack.c.b16 %v2055, %v2044
    %v2375 = vpack.c.b16 %v2056, %v2045
    %v2376 = vpack.c.b16 %v2057, %v2046
    %v2377 = vpack.c.b16 %v2058, %v2047
    %v2378 = vpack.c.b16 %v2059, %v2048
    %v2379 = vpack.c.b16 %v2060, %v2049
    %v2380 = vpack.c.b16 %v2061, %v2050
    %v2381 = vpack.c.b16 %v2062, %v2051
    %v2382 = vpack.c.b16 %v2063, %v2052
    %v2383 = vpack.c.b16 %v2075, %v2064
    %v2384 = vpack.c.b16 %v2076, %v2065
    %v2385 = vpack.c.b16 %v2077, %v2066
    %v2386 = vpack.c.b16 %v2078, %v2067
    %v2387 = vpack.c.b16 %v2079, %v2068
    %v2388 = vpack.c.b16 %v2080, %v2069
    %v2389 = vpack.c.b16 %v2081, %v2070
    %v2390 = vpack.c.b16 %v2082, %v2071
    %v2391 = vpack.c.b16 %v2083, %v2072
    %v2392 = vpack.c.b16 %v2084, %v2073
    %v2393 = vpack.c.b16 %v2085, %v2074
    %v2394 = vpack.c.b16 %v2097, %v2086
    %v2395 = vpack.c.b16 %v2098, %v2087
    %v2396 = vpack.c.b16 %v2099, %v2088
    %v2397 = vpack.c.b16 %v2100, %v2089
    %v2398 = vpack.c.b16 %v2101, %v2090
    %v2399 = vpack.c.b16 %v2102, %v2091
    %v2400 = vpack.c.b16 %v2103, %v2092
    %v2401 = vpack.c.b16 %v2104, %v2093
    %v2402 = vpack.c.b16 %v2105, %v2094
    %v2403 = vpack.c.b16 %v2106, %v2095
    %v2404 = vpack.c.b16 %v2107, %v2096
    %v2405 = vpack.c.b16 %v2119, %v2108
    %v2406 = vpack.c.b16 %v2120, %v2109
    %v2407 = vpack.c.b16 %v2121, %v2110
    %v2408 = vpack.c.b16 %v2122, %v2111
    %v2409 = vpack.c.b16 %v2123, %v2112
    %v2410 = vpack.c.b16 %v2124, %v2113
    %v2411 = vpack.c.b16 %v2125, %v2114
    %v2412 = vpack.c.b16 %v2126, %v2115
    %v2413 = vpack.c.b16 %v2127, %v2116
    %v2414 = vpack.c.b16 %v2128, %v2117
    %v2415 = vpack.c.b16 %v2129, %v2118
    %v2416 = vpack.c.b16 %v2141, %v2130
    %v2417 = vpack.c.b16 %v2142, %v2131
    %v2418 = vpack.c.b16 %v2143, %v2132
    %v2419 = vpack.c.b16 %v2144, %v2133
    %v2420 = vpack.c.b16 %v2145, %v2134
    %v2421 = vpack.c.b16 %v2146, %v2135
    %v2422 = vpack.c.b16 %v2147, %v2136
    %v2423 = vpack.c.b16 %v2148, %v2137
    %v2424 = vpack.c.b16 %v2149, %v2138
    %v2425 = vpack.c.b16 %v2150, %v2139
    %v2426 = vpack.c.b16 %v2151, %v2140
    %v2703 = vsel %vm715, %v942, 0
    %2705 = vmatprep.subr.bf16.mxu0 %v2153
    %2706 = vmatpush1.bf16.msra.mxu0 %v2152
    %2707 = vmatprep.subr.bf16.mxu0 %v2164
    %2708 = vmatpush1.bf16.msra.mxu0 %v2163
    %2709 = vmatprep.subr.bf16.mxu0 %v2175
    %2710 = vmatpush1.bf16.msra.mxu0 %v2174
    %2711 = vmatprep.subr.bf16.mxu0 %v2186
    %2712 = vmatpush1.bf16.msra.mxu0 %v2185
    %2713 = vmatprep.subr.bf16.mxu0 %v2197
    %2714 = vmatpush1.bf16.msra.mxu0 %v2196
    %2715 = vmatprep.subr.bf16.mxu0 %v2208
    %2716 = vmatpush1.bf16.msra.mxu0 %v2207
    %2717 = vmatprep.subr.bf16.mxu0 %v2219
    %2718 = vmatpush1.bf16.msra.mxu0 %v2218
    %2719 = vmatprep.subr.bf16.mxu0 %v2230
    %2720 = vmatpush1.bf16.msra.mxu0 %v2229
    %2721 = vmatprep.subr.bf16.mxu0 %v2241
    %2722 = vmatpush1.bf16.msra.mxu0 %v2240
    %2723 = vmatprep.subr.bf16.mxu0 %v2252
    %2724 = vmatpush1.bf16.msra.mxu0 %v2251
    %2725 = vmatprep.subr.bf16.mxu0 %v2263
    %2726 = vmatpush1.bf16.msra.mxu0 %v2262
    %2727 = vmatprep.subr.bf16.mxu0 %v2274
    %2728 = vmatpush1.bf16.msra.mxu0 %v2273
    %2729 = vmatprep.subr.bf16.mxu0 %v2285
    %2730 = vmatpush1.bf16.msra.mxu0 %v2284
    %2731 = vmatprep.subr.bf16.mxu0 %v2296
    %2732 = vmatpush1.bf16.msra.mxu0 %v2295
    %2733 = vmatprep.subr.bf16.mxu0 %v2307
    %2734 = vmatpush1.bf16.msra.mxu0 %v2306
    %2735 = vmatprep.subr.bf16.mxu0 %v2318
    %2736 = vmatpush1.bf16.msra.mxu0 %v2317
    %2737 = vmatprep.mubr.bf16.mxu0 %v940
    %2738 = vmatmul.mubr.bf16.gmra.mrb[0].mxu0 %v939
    %v2739 = vpop.f32.mrb[0].mxu0
    %v2740 = vadd.f32 %v1250, %v2739
    %v2741 = vpop.f32.mrb[0].mxu0
    %v2742 = vadd.f32 %v1254, %v2741
    %v2743 = vpop.f32.mrb[0].mxu0
    %v2744 = vpop.f32.mrb[0].mxu0
    %2745 = vdwg.mxu0
    %2746 = vmatprep.subr.bf16.mxu0 %v2329
    %2747 = vmatpush1.bf16.msra.mxu0 %v2328
    %2748 = vmatprep.subr.bf16.mxu0 %v2340
    %2749 = vmatpush1.bf16.msra.mxu0 %v2339
    %2750 = vmatprep.subr.bf16.mxu0 %v2351
    %2751 = vmatpush1.bf16.msra.mxu0 %v2350
    %2752 = vmatprep.subr.bf16.mxu0 %v2362
    %2753 = vmatpush1.bf16.msra.mxu0 %v2361
    %2754 = vmatprep.subr.bf16.mxu0 %v2373
    %2755 = vmatpush1.bf16.msra.mxu0 %v2372
    %2756 = vmatprep.subr.bf16.mxu0 %v2384
    %2757 = vmatpush1.bf16.msra.mxu0 %v2383
    %2758 = vmatprep.subr.bf16.mxu0 %v2395
    %2759 = vmatpush1.bf16.msra.mxu0 %v2394
    %2760 = vmatprep.subr.bf16.mxu0 %v2406
    %2761 = vmatpush1.bf16.msra.mxu0 %v2405
    %2762 = vmatprep.subr.bf16.mxu0 %v2417
    %2763 = vmatpush1.bf16.msra.mxu0 %v2416
    %2764 = vmatprep.subr.bf16.mxu0 0
    %2765 = vmatpush1.bf16.msra.mxu0 0
    %2766 = vmatprep.subr.bf16.mxu0 0
    %2767 = vmatpush1.bf16.msra.mxu0 0
    %2768 = vmatprep.subr.bf16.mxu0 0
    %2769 = vmatpush1.bf16.msra.mxu0 0
    %2770 = vmatprep.subr.bf16.mxu0 0
    %2771 = vmatpush1.bf16.msra.mxu0 0
    %2772 = vmatprep.subr.bf16.mxu0 0
    %2773 = vmatpush1.bf16.msra.mxu0 0
    %2774 = vmatprep.subr.bf16.mxu0 0
    %2775 = vmatpush1.bf16.msra.mxu0 0
    %2776 = vmatprep.subr.bf16.mxu0 0
    %2777 = vmatpush1.bf16.msra.mxu0 0
    %2778 = vmatprep.mubr.bf16.mxu0 %v2703
    %2779 = vmatmul.mubr.bf16.gmra.mrb[0].mxu0 %v941
    %v2780 = vpop.f32.mrb[0].mxu0
    %v2781 = vadd.f32 %v2740, %v2780
    %v2782 = vpop.f32.mrb[0].mxu0
    %v2783 = vadd.f32 %v2742, %v2782
    %v2784 = vpop.f32.mrb[0].mxu0
    %v2785 = vpop.f32.mrb[0].mxu0
    %2786 = vdwg.mxu0
    %2787 = vmatprep.subr.bf16.mxu0 %v2155
    %2788 = vmatpush1.bf16.msra.mxu0 %v2154
    %2789 = vmatprep.subr.bf16.mxu0 %v2166
    %2790 = vmatpush1.bf16.msra.mxu0 %v2165
    %2791 = vmatprep.subr.bf16.mxu0 %v2177
    %2792 = vmatpush1.bf16.msra.mxu0 %v2176
    %2793 = vmatprep.subr.bf16.mxu0 %v2188
    %2794 = vmatpush1.bf16.msra.mxu0 %v2187
    %2795 = vmatprep.subr.bf16.mxu0 %v2199
    %2796 = vmatpush1.bf16.msra.mxu0 %v2198
    %2797 = vmatprep.subr.bf16.mxu0 %v2210
    %2798 = vmatpush1.bf16.msra.mxu0 %v2209
    %2799 = vmatprep.subr.bf16.mxu0 %v2221
    %2800 = vmatpush1.bf16.msra.mxu0 %v2220
    %2801 = vmatprep.subr.bf16.mxu0 %v2232
    %2802 = vmatpush1.bf16.msra.mxu0 %v2231
    %2803 = vmatprep.subr.bf16.mxu0 %v2243
    %2804 = vmatpush1.bf16.msra.mxu0 %v2242
    %2805 = vmatprep.subr.bf16.mxu0 %v2254
    %2806 = vmatpush1.bf16.msra.mxu0 %v2253
    %2807 = vmatprep.subr.bf16.mxu0 %v2265
    %2808 = vmatpush1.bf16.msra.mxu0 %v2264
    %2809 = vmatprep.subr.bf16.mxu0 %v2276
    %2810 = vmatpush1.bf16.msra.mxu0 %v2275
    %2811 = vmatprep.subr.bf16.mxu0 %v2287
    %2812 = vmatpush1.bf16.msra.mxu0 %v2286
    %2813 = vmatprep.subr.bf16.mxu0 %v2298
    %2814 = vmatpush1.bf16.msra.mxu0 %v2297
    %2815 = vmatprep.subr.bf16.mxu0 %v2309
    %2816 = vmatpush1.bf16.msra.mxu0 %v2308
    %2817 = vmatprep.subr.bf16.mxu0 %v2320
    %2818 = vmatpush1.bf16.msra.mxu0 %v2319
    %2819 = vmatprep.mubr.bf16.mxu0 %v940
    %2820 = vmatmul.mubr.bf16.gmra.mrb[0].mxu0 %v939
    %v2821 = vpop.f32.mrb[0].mxu0
    %v2822 = vadd.f32 %v1258, %v2821
    %v2823 = vpop.f32.mrb[0].mxu0
    %v2824 = vadd.f32 %v1262, %v2823
    %v2825 = vpop.f32.mrb[0].mxu0
    %v2826 = vpop.f32.mrb[0].mxu0
    %2827 = vdwg.mxu0
    %2828 = vmatprep.subr.bf16.mxu0 %v2331
    %2829 = vmatpush1.bf16.msra.mxu0 %v2330
    %2830 = vmatprep.subr.bf16.mxu0 %v2342
    %2831 = vmatpush1.bf16.msra.mxu0 %v2341
    %2832 = vmatprep.subr.bf16.mxu0 %v2353
    %2833 = vmatpush1.bf16.msra.mxu0 %v2352
    %2834 = vmatprep.subr.bf16.mxu0 %v2364
    %2835 = vmatpush1.bf16.msra.mxu0 %v2363
    %2836 = vmatprep.subr.bf16.mxu0 %v2375
    %2837 = vmatpush1.bf16.msra.mxu0 %v2374
    %2838 = vmatprep.subr.bf16.mxu0 %v2386
    %2839 = vmatpush1.bf16.msra.mxu0 %v2385
    %2840 = vmatprep.subr.bf16.mxu0 %v2397
    %2841 = vmatpush1.bf16.msra.mxu0 %v2396
    %2842 = vmatprep.subr.bf16.mxu0 %v2408
    %2843 = vmatpush1.bf16.msra.mxu0 %v2407
    %2844 = vmatprep.subr.bf16.mxu0 %v2419
    %2845 = vmatpush1.bf16.msra.mxu0 %v2418
    %2846 = vmatprep.subr.bf16.mxu0 0
    %2847 = vmatpush1.bf16.msra.mxu0 0
    %2848 = vmatprep.subr.bf16.mxu0 0
    %2849 = vmatpush1.bf16.msra.mxu0 0
    %2850 = vmatprep.subr.bf16.mxu0 0
    %2851 = vmatpush1.bf16.msra.mxu0 0
    %2852 = vmatprep.subr.bf16.mxu0 0
    %2853 = vmatpush1.bf16.msra.mxu0 0
    %2854 = vmatprep.subr.bf16.mxu0 0
    %2855 = vmatpush1.bf16.msra.mxu0 0
    %2856 = vmatprep.subr.bf16.mxu0 0
    %2857 = vmatpush1.bf16.msra.mxu0 0
    %2858 = vmatprep.subr.bf16.mxu0 0
    %2859 = vmatpush1.bf16.msra.mxu0 0
    %2860 = vmatprep.mubr.bf16.mxu0 %v2703
    %2861 = vmatmul.mubr.bf16.gmra.mrb[0].mxu0 %v941
    %v2862 = vpop.f32.mrb[0].mxu0
    %v2863 = vadd.f32 %v2822, %v2862
    %v2864 = vpop.f32.mrb[0].mxu0
    %v2865 = vadd.f32 %v2824, %v2864
    %v2866 = vpop.f32.mrb[0].mxu0
    %v2867 = vpop.f32.mrb[0].mxu0
    %2868 = vdwg.mxu0
    %2869 = vmatprep.subr.bf16.mxu0 %v2157
    %2870 = vmatpush1.bf16.msra.mxu0 %v2156
    %2871 = vmatprep.subr.bf16.mxu0 %v2168
    %2872 = vmatpush1.bf16.msra.mxu0 %v2167
    %2873 = vmatprep.subr.bf16.mxu0 %v2179
    %2874 = vmatpush1.bf16.msra.mxu0 %v2178
    %2875 = vmatprep.subr.bf16.mxu0 %v2190
    %2876 = vmatpush1.bf16.msra.mxu0 %v2189
    %2877 = vmatprep.subr.bf16.mxu0 %v2201
    %2878 = vmatpush1.bf16.msra.mxu0 %v2200
    %2879 = vmatprep.subr.bf16.mxu0 %v2212
    %2880 = vmatpush1.bf16.msra.mxu0 %v2211
    %2881 = vmatprep.subr.bf16.mxu0 %v2223
    %2882 = vmatpush1.bf16.msra.mxu0 %v2222
    %2883 = vmatprep.subr.bf16.mxu0 %v2234
    %2884 = vmatpush1.bf16.msra.mxu0 %v2233
    %2885 = vmatprep.subr.bf16.mxu0 %v2245
    %2886 = vmatpush1.bf16.msra.mxu0 %v2244
    %2887 = vmatprep.subr.bf16.mxu0 %v2256
    %2888 = vmatpush1.bf16.msra.mxu0 %v2255
    %2889 = vmatprep.subr.bf16.mxu0 %v2267
    %2890 = vmatpush1.bf16.msra.mxu0 %v2266
    %2891 = vmatprep.subr.bf16.mxu0 %v2278
    %2892 = vmatpush1.bf16.msra.mxu0 %v2277
    %2893 = vmatprep.subr.bf16.mxu0 %v2289
    %2894 = vmatpush1.bf16.msra.mxu0 %v2288
    %2895 = vmatprep.subr.bf16.mxu0 %v2300
    %2896 = vmatpush1.bf16.msra.mxu0 %v2299
    %2897 = vmatprep.subr.bf16.mxu0 %v2311
    %2898 = vmatpush1.bf16.msra.mxu0 %v2310
    %2899 = vmatprep.subr.bf16.mxu0 %v2322
    %2900 = vmatpush1.bf16.msra.mxu0 %v2321
    %2901 = vmatprep.mubr.bf16.mxu0 %v940
    %2902 = vmatmul.mubr.bf16.gmra.mrb[0].mxu0 %v939
    %v2903 = vpop.f32.mrb[0].mxu0
    %v2904 = vadd.f32 %v1266, %v2903
    %v2905 = vpop.f32.mrb[0].mxu0
    %v2906 = vadd.f32 %v1270, %v2905
    %v2907 = vpop.f32.mrb[0].mxu0
    %v2908 = vpop.f32.mrb[0].mxu0
    %2909 = vdwg.mxu0
    %2910 = vmatprep.subr.bf16.mxu0 %v2333
    %2911 = vmatpush1.bf16.msra.mxu0 %v2332
    %2912 = vmatprep.subr.bf16.mxu0 %v2344
    %2913 = vmatpush1.bf16.msra.mxu0 %v2343
    %2914 = vmatprep.subr.bf16.mxu0 %v2355
    %2915 = vmatpush1.bf16.msra.mxu0 %v2354
    %2916 = vmatprep.subr.bf16.mxu0 %v2366
    %2917 = vmatpush1.bf16.msra.mxu0 %v2365
    %2918 = vmatprep.subr.bf16.mxu0 %v2377
    %2919 = vmatpush1.bf16.msra.mxu0 %v2376
    %2920 = vmatprep.subr.bf16.mxu0 %v2388
    %2921 = vmatpush1.bf16.msra.mxu0 %v2387
    %2922 = vmatprep.subr.bf16.mxu0 %v2399
    %2923 = vmatpush1.bf16.msra.mxu0 %v2398
    %2924 = vmatprep.subr.bf16.mxu0 %v2410
    %2925 = vmatpush1.bf16.msra.mxu0 %v2409
    %2926 = vmatprep.subr.bf16.mxu0 %v2421
    %2927 = vmatpush1.bf16.msra.mxu0 %v2420
    %2928 = vmatprep.subr.bf16.mxu0 0
    %2929 = vmatpush1.bf16.msra.mxu0 0
    %2930 = vmatprep.subr.bf16.mxu0 0
    %2931 = vmatpush1.bf16.msra.mxu0 0
    %2932 = vmatprep.subr.bf16.mxu0 0
    %2933 = vmatpush1.bf16.msra.mxu0 0
    %2934 = vmatprep.subr.bf16.mxu0 0
    %2935 = vmatpush1.bf16.msra.mxu0 0
    %2936 = vmatprep.subr.bf16.mxu0 0
    %2937 = vmatpush1.bf16.msra.mxu0 0
    %2938 = vmatprep.subr.bf16.mxu0 0
    %2939 = vmatpush1.bf16.msra.mxu0 0
    %2940 = vmatprep.subr.bf16.mxu0 0
    %2941 = vmatpush1.bf16.msra.mxu0 0
    %2942 = vmatprep.mubr.bf16.mxu0 %v2703
    %2943 = vmatmul.mubr.bf16.gmra.mrb[0].mxu0 %v941
    %v2944 = vpop.f32.mrb[0].mxu0
    %v2945 = vadd.f32 %v2904, %v2944
    %v2946 = vpop.f32.mrb[0].mxu0
    %v2947 = vadd.f32 %v2906, %v2946
    %v2948 = vpop.f32.mrb[0].mxu0
    %v2949 = vpop.f32.mrb[0].mxu0
    %2950 = vdwg.mxu0
    %2951 = vmatprep.subr.bf16.mxu0 %v2159
    %2952 = vmatpush1.bf16.msra.mxu0 %v2158
    %2953 = vmatprep.subr.bf16.mxu0 %v2170
    %2954 = vmatpush1.bf16.msra.mxu0 %v2169
    %2955 = vmatprep.subr.bf16.mxu0 %v2181
    %2956 = vmatpush1.bf16.msra.mxu0 %v2180
    %2957 = vmatprep.subr.bf16.mxu0 %v2192
    %2958 = vmatpush1.bf16.msra.mxu0 %v2191
    %2959 = vmatprep.subr.bf16.mxu0 %v2203
    %2960 = vmatpush1.bf16.msra.mxu0 %v2202
    %2961 = vmatprep.subr.bf16.mxu0 %v2214
    %2962 = vmatpush1.bf16.msra.mxu0 %v2213
    %2963 = vmatprep.subr.bf16.mxu0 %v2225
    %2964 = vmatpush1.bf16.msra.mxu0 %v2224
    %2965 = vmatprep.subr.bf16.mxu0 %v2236
    %2966 = vmatpush1.bf16.msra.mxu0 %v2235
    %2967 = vmatprep.subr.bf16.mxu0 %v2247
    %2968 = vmatpush1.bf16.msra.mxu0 %v2246
    %2969 = vmatprep.subr.bf16.mxu0 %v2258
    %2970 = vmatpush1.bf16.msra.mxu0 %v2257
    %2971 = vmatprep.subr.bf16.mxu0 %v2269
    %2972 = vmatpush1.bf16.msra.mxu0 %v2268
    %2973 = vmatprep.subr.bf16.mxu0 %v2280
    %2974 = vmatpush1.bf16.msra.mxu0 %v2279
    %2975 = vmatprep.subr.bf16.mxu0 %v2291
    %2976 = vmatpush1.bf16.msra.mxu0 %v2290
    %2977 = vmatprep.subr.bf16.mxu0 %v2302
    %2978 = vmatpush1.bf16.msra.mxu0 %v2301
    %2979 = vmatprep.subr.bf16.mxu0 %v2313
    %2980 = vmatpush1.bf16.msra.mxu0 %v2312
    %2981 = vmatprep.subr.bf16.mxu0 %v2324
    %2982 = vmatpush1.bf16.msra.mxu0 %v2323
    %2983 = vmatprep.mubr.bf16.mxu0 %v940
    %2984 = vmatmul.mubr.bf16.gmra.mrb[0].mxu0 %v939
    %v2985 = vpop.f32.mrb[0].mxu0
    %v2986 = vadd.f32 %v1274, %v2985
    %v2987 = vpop.f32.mrb[0].mxu0
    %v2988 = vadd.f32 %v1278, %v2987
    %v2989 = vpop.f32.mrb[0].mxu0
    %v2990 = vpop.f32.mrb[0].mxu0
    %2991 = vdwg.mxu0
    %2992 = vmatprep.subr.bf16.mxu0 %v2335
    %2993 = vmatpush1.bf16.msra.mxu0 %v2334
    %2994 = vmatprep.subr.bf16.mxu0 %v2346
    %2995 = vmatpush1.bf16.msra.mxu0 %v2345
    %2996 = vmatprep.subr.bf16.mxu0 %v2357
    %2997 = vmatpush1.bf16.msra.mxu0 %v2356
    %2998 = vmatprep.subr.bf16.mxu0 %v2368
    %2999 = vmatpush1.bf16.msra.mxu0 %v2367
    %3000 = vmatprep.subr.bf16.mxu0 %v2379
    %3001 = vmatpush1.bf16.msra.mxu0 %v2378
    %3002 = vmatprep.subr.bf16.mxu0 %v2390
    %3003 = vmatpush1.bf16.msra.mxu0 %v2389
    %3004 = vmatprep.subr.bf16.mxu0 %v2401
    %3005 = vmatpush1.bf16.msra.mxu0 %v2400
    %3006 = vmatprep.subr.bf16.mxu0 %v2412
    %3007 = vmatpush1.bf16.msra.mxu0 %v2411
    %3008 = vmatprep.subr.bf16.mxu0 %v2423
    %3009 = vmatpush1.bf16.msra.mxu0 %v2422
    %3010 = vmatprep.subr.bf16.mxu0 0
    %3011 = vmatpush1.bf16.msra.mxu0 0
    %3012 = vmatprep.subr.bf16.mxu0 0
    %3013 = vmatpush1.bf16.msra.mxu0 0
    %3014 = vmatprep.subr.bf16.mxu0 0
    %3015 = vmatpush1.bf16.msra.mxu0 0
    %3016 = vmatprep.subr.bf16.mxu0 0
    %3017 = vmatpush1.bf16.msra.mxu0 0
    %3018 = vmatprep.subr.bf16.mxu0 0
    %3019 = vmatpush1.bf16.msra.mxu0 0
    %3020 = vmatprep.subr.bf16.mxu0 0
    %3021 = vmatpush1.bf16.msra.mxu0 0
    %3022 = vmatprep.subr.bf16.mxu0 0
    %3023 = vmatpush1.bf16.msra.mxu0 0
    %3024 = vmatprep.mubr.bf16.mxu0 %v2703
    %3025 = vmatmul.mubr.bf16.gmra.mrb[0].mxu0 %v941
    %v3026 = vpop.f32.mrb[0].mxu0
    %v3027 = vadd.f32 %v2986, %v3026
    %v3028 = vpop.f32.mrb[0].mxu0
    %v3029 = vadd.f32 %v2988, %v3028
    %v3030 = vpop.f32.mrb[0].mxu0
    %v3031 = vpop.f32.mrb[0].mxu0
    %3032 = vdwg.mxu0
    %3033 = vmatprep.subr.bf16.mxu0 %v2161
    %3034 = vmatpush1.bf16.msra.mxu0 %v2160
    %3035 = vmatprep.subr.bf16.mxu0 %v2172
    %3036 = vmatpush1.bf16.msra.mxu0 %v2171
    %3037 = vmatprep.subr.bf16.mxu0 %v2183
    %3038 = vmatpush1.bf16.msra.mxu0 %v2182
    %3039 = vmatprep.subr.bf16.mxu0 %v2194
    %3040 = vmatpush1.bf16.msra.mxu0 %v2193
    %3041 = vmatprep.subr.bf16.mxu0 %v2205
    %3042 = vmatpush1.bf16.msra.mxu0 %v2204
    %3043 = vmatprep.subr.bf16.mxu0 %v2216
    %3044 = vmatpush1.bf16.msra.mxu0 %v2215
    %3045 = vmatprep.subr.bf16.mxu0 %v2227
    %3046 = vmatpush1.bf16.msra.mxu0 %v2226
    %3047 = vmatprep.subr.bf16.mxu0 %v2238
    %3048 = vmatpush1.bf16.msra.mxu0 %v2237
    %3049 = vmatprep.subr.bf16.mxu0 %v2249
    %3050 = vmatpush1.bf16.msra.mxu0 %v2248
    %3051 = vmatprep.subr.bf16.mxu0 %v2260
    %3052 = vmatpush1.bf16.msra.mxu0 %v2259
    %3053 = vmatprep.subr.bf16.mxu0 %v2271
    %3054 = vmatpush1.bf16.msra.mxu0 %v2270
    %3055 = vmatprep.subr.bf16.mxu0 %v2282
    %3056 = vmatpush1.bf16.msra.mxu0 %v2281
    %3057 = vmatprep.subr.bf16.mxu0 %v2293
    %3058 = vmatpush1.bf16.msra.mxu0 %v2292
    %3059 = vmatprep.subr.bf16.mxu0 %v2304
    %3060 = vmatpush1.bf16.msra.mxu0 %v2303
    %3061 = vmatprep.subr.bf16.mxu0 %v2315
    %3062 = vmatpush1.bf16.msra.mxu0 %v2314
    %3063 = vmatprep.subr.bf16.mxu0 %v2326
    %3064 = vmatpush1.bf16.msra.mxu0 %v2325
    %3065 = vmatprep.mubr.bf16.mxu0 %v940
    %3066 = vmatmul.mubr.bf16.gmra.mrb[0].mxu0 %v939
    %v3067 = vpop.f32.mrb[0].mxu0
    %v3068 = vadd.f32 %v1282, %v3067
    %v3069 = vpop.f32.mrb[0].mxu0
    %v3070 = vadd.f32 %v1286, %v3069
    %v3071 = vpop.f32.mrb[0].mxu0
    %v3072 = vpop.f32.mrb[0].mxu0
    %3073 = vdwg.mxu0
    %3074 = vmatprep.subr.bf16.mxu0 %v2337
    %3075 = vmatpush1.bf16.msra.mxu0 %v2336
    %3076 = vmatprep.subr.bf16.mxu0 %v2348
    %3077 = vmatpush1.bf16.msra.mxu0 %v2347
    %3078 = vmatprep.subr.bf16.mxu0 %v2359
    %3079 = vmatpush1.bf16.msra.mxu0 %v2358
    %3080 = vmatprep.subr.bf16.mxu0 %v2370
    %3081 = vmatpush1.bf16.msra.mxu0 %v2369
    %3082 = vmatprep.subr.bf16.mxu0 %v2381
    %3083 = vmatpush1.bf16.msra.mxu0 %v2380
    %3084 = vmatprep.subr.bf16.mxu0 %v2392
    %3085 = vmatpush1.bf16.msra.mxu0 %v2391
    %3086 = vmatprep.subr.bf16.mxu0 %v2403
    %3087 = vmatpush1.bf16.msra.mxu0 %v2402
    %3088 = vmatprep.subr.bf16.mxu0 %v2414
    %3089 = vmatpush1.bf16.msra.mxu0 %v2413
    %3090 = vmatprep.subr.bf16.mxu0 %v2425
    %3091 = vmatpush1.bf16.msra.mxu0 %v2424
    %3092 = vmatprep.subr.bf16.mxu0 0
    %3093 = vmatpush1.bf16.msra.mxu0 0
    %3094 = vmatprep.subr.bf16.mxu0 0
    %3095 = vmatpush1.bf16.msra.mxu0 0
    %3096 = vmatprep.subr.bf16.mxu0 0
    %3097 = vmatpush1.bf16.msra.mxu0 0
    %3098 = vmatprep.subr.bf16.mxu0 0
    %3099 = vmatpush1.bf16.msra.mxu0 0
    %3100 = vmatprep.subr.bf16.mxu0 0
    %3101 = vmatpush1.bf16.msra.mxu0 0
    %3102 = vmatprep.subr.bf16.mxu0 0
    %3103 = vmatpush1.bf16.msra.mxu0 0
    %3104 = vmatprep.subr.bf16.mxu0 0
    %3105 = vmatpush1.bf16.msra.mxu0 0
    %3106 = vmatprep.mubr.bf16.mxu0 %v2703
    %3107 = vmatmul.mubr.bf16.gmra.mrb[0].mxu0 %v941
    %v3108 = vpop.f32.mrb[0].mxu0
    %v3109 = vadd.f32 %v3068, %v3108
    %v3110 = vpop.f32.mrb[0].mxu0
    %v3111 = vadd.f32 %v3070, %v3110
    %v3112 = vpop.f32.mrb[0].mxu0
    %v3113 = vpop.f32.mrb[0].mxu0
    %3114 = vdwg.mxu0
    %3115 = vmatprep.subr.bf16.mxu0 0
    %3116 = vmatpush1.bf16.msra.mxu0 %v2162
    %3117 = vmatprep.subr.bf16.mxu0 0
    %3118 = vmatpush1.bf16.msra.mxu0 %v2173
    %3119 = vmatprep.subr.bf16.mxu0 0
    %3120 = vmatpush1.bf16.msra.mxu0 %v2184
    %3121 = vmatprep.subr.bf16.mxu0 0
    %3122 = vmatpush1.bf16.msra.mxu0 %v2195
    %3123 = vmatprep.subr.bf16.mxu0 0
    %3124 = vmatpush1.bf16.msra.mxu0 %v2206
    %3125 = vmatprep.subr.bf16.mxu0 0
    %3126 = vmatpush1.bf16.msra.mxu0 %v2217
    %3127 = vmatprep.subr.bf16.mxu0 0
    %3128 = vmatpush1.bf16.msra.mxu0 %v2228
    %3129 = vmatprep.subr.bf16.mxu0 0
    %3130 = vmatpush1.bf16.msra.mxu0 %v2239
    %3131 = vmatprep.subr.bf16.mxu0 0
    %3132 = vmatpush1.bf16.msra.mxu0 %v2250
    %3133 = vmatprep.subr.bf16.mxu0 0
    %3134 = vmatpush1.bf16.msra.mxu0 %v2261
    %3135 = vmatprep.subr.bf16.mxu0 0
    %3136 = vmatpush1.bf16.msra.mxu0 %v2272
    %3137 = vmatprep.subr.bf16.mxu0 0
    %3138 = vmatpush1.bf16.msra.mxu0 %v2283
    %3139 = vmatprep.subr.bf16.mxu0 0
    %3140 = vmatpush1.bf16.msra.mxu0 %v2294
    %3141 = vmatprep.subr.bf16.mxu0 0
    %3142 = vmatpush1.bf16.msra.mxu0 %v2305
    %3143 = vmatprep.subr.bf16.mxu0 0
    %3144 = vmatpush1.bf16.msra.mxu0 %v2316
    %3145 = vmatprep.subr.bf16.mxu0 0
    %3146 = vmatpush1.bf16.msra.mxu0 %v2327
    %3147 = vmatprep.mubr.bf16.mxu0 %v940
    %3148 = vmatmul.mubr.bf16.gmra.mrb[0].mxu0 %v939
    %v3149 = vpop.f32.mrb[0].mxu0
    %v3150 = vadd.f32 %v1290, %v3149
    %v3151 = vpop.f32.mrb[0].mxu0
    %v3152 = vpop.f32.mrb[0].mxu0
    %v3153 = vpop.f32.mrb[0].mxu0
    %3154 = vdwg.mxu0
    %3155 = vmatprep.subr.bf16.mxu0 0
    %3156 = vmatpush1.bf16.msra.mxu0 %v2338
    %3157 = vmatprep.subr.bf16.mxu0 0
    %3158 = vmatpush1.bf16.msra.mxu0 %v2349
    %3159 = vmatprep.subr.bf16.mxu0 0
    %3160 = vmatpush1.bf16.msra.mxu0 %v2360
    %3161 = vmatprep.subr.bf16.mxu0 0
    %3162 = vmatpush1.bf16.msra.mxu0 %v2371
    %3163 = vmatprep.subr.bf16.mxu0 0
    %3164 = vmatpush1.bf16.msra.mxu0 %v2382
    %3165 = vmatprep.subr.bf16.mxu0 0
    %3166 = vmatpush1.bf16.msra.mxu0 %v2393
    %3167 = vmatprep.subr.bf16.mxu0 0
    %3168 = vmatpush1.bf16.msra.mxu0 %v2404
    %3169 = vmatprep.subr.bf16.mxu0 0
    %3170 = vmatpush1.bf16.msra.mxu0 %v2415
    %3171 = vmatprep.subr.bf16.mxu0 0
    %3172 = vmatpush1.bf16.msra.mxu0 %v2426
    %3173 = vmatprep.subr.bf16.mxu0 0
    %3174 = vmatpush1.bf16.msra.mxu0 0
    %3175 = vmatprep.subr.bf16.mxu0 0
    %3176 = vmatpush1.bf16.msra.mxu0 0
    %3177 = vmatprep.subr.bf16.mxu0 0
    %3178 = vmatpush1.bf16.msra.mxu0 0
    %3179 = vmatprep.subr.bf16.mxu0 0
    %3180 = vmatpush1.bf16.msra.mxu0 0
    %3181 = vmatprep.subr.bf16.mxu0 0
    %3182 = vmatpush1.bf16.msra.mxu0 0
    %3183 = vmatprep.subr.bf16.mxu0 0
    %3184 = vmatpush1.bf16.msra.mxu0 0
    %3185 = vmatprep.subr.bf16.mxu0 0
    %3186 = vmatpush1.bf16.msra.mxu0 0
    %3187 = vmatprep.mubr.bf16.mxu0 %v2703
    %3188 = vmatmul.mubr.bf16.gmra.mrb[0].mxu0 %v941
    %v3189 = vpop.f32.mrb[0].mxu0
    %v3190 = vadd.f32 %v3150, %v3189
    %v3191 = vpop.f32.mrb[0].mxu0
    %v3192 = vpop.f32.mrb[0].mxu0
    %v3193 = vpop.f32.mrb[0].mxu0
    %3194 = vdwg.mxu0
    %v3195 = vmax.f32 %v2781, %v2945
    %v3196 = vmax.f32 %v2783, %v2947
    %v3197 = vmax.f32 %v3195, %v3196
    %v3198 = vmax.f32 %v2863, %v2865
    %v3199 = vmax.f32 %v3197, %v3198
    %3200 = vmax.xlane.f32.xlu0 %v3199
    %v3201 = vpop.xlane.xlu0 %3200
    %v3202 = vsub.f32 %v2781, %v3201
    %v3203 = vsub.f32 %v2783, %v3201
    %v3204 = vsub.f32 %v2863, %v3201
    %v3205 = vsub.f32 %v2865, %v3201
    %v3206 = vsub.f32 %v2945, %v3201
    %v3207 = vsub.f32 %v2947, %v3201
    %v3208 = vmul.f32 %v3202, 1.442695
    %v3209 = vpow.pop %v3208
    %v3210 = vmul.f32 %v3203, 1.442695
    %v3211 = vpow.pop %v3210
    %v3212 = vmul.f32 %v3204, 1.442695
    %v3213 = vpow.pop %v3212
    %v3214 = vmul.f32 %v3205, 1.442695
    %v3215 = vpow.pop %v3214
    %v3216 = vmul.f32 %v3206, 1.442695
    %v3217 = vpow.pop %v3216
    %v3218 = vmul.f32 %v3207, 1.442695
    %v3219 = vpow.pop %v3218
    %v3220 = vadd.f32 %v3209, %v3211
    %v3221 = vadd.f32 %v3220, %v3213
    %v3222 = vadd.f32 %v3221, %v3215
    %v3223 = vadd.f32 %v3222, %v3217
    %v3224 = vadd.f32 %v3223, %v3219
    %3225 = vadd.xlane.f32.xlu0 %v3224
    %v3226 = vpop.xlane.xlu0 %3225
    %v3227 = vlog2.pop %v3226
    %v3228 = vmul.f32 %v3227, 0.6931472
    %v3229 = vsub.f32 %v3202, %v3228
    %v3230 = vsub.f32 %v3203, %v3228
    %v3231 = vsub.f32 %v3204, %v3228
    %v3232 = vsub.f32 %v3205, %v3228
    %v3233 = vsub.f32 %v3206, %v3228
    %v3234 = vsub.f32 %v3207, %v3228
    %3235 = vst [vmem:[#allocation17] sm:$0xff] %v3229
    %3236 = vst [vmem:[#allocation17 + $0x8] sm:$0xff] %v3230
    %3237 = vst [vmem:[#allocation17 + $0x10] sm:$0xff] %v3231
    %3238 = vst [vmem:[#allocation17 + $0x18] sm:$0xff] %v3232
    %3239 = vst [vmem:[#allocation17 + $0x20] sm:$0xff] %v3233
    %3240 = vst [vmem:[#allocation17 + $0x28] sm:$0xff] %v3234
    %v3241 = vmax.f32 %v3027, %v3029
    %v3242 = vmax.f32 %v3241, %v3109
    %3243 = vmax.xlane.f32.xlu0 %v3242
    %v3244 = vpop.xlane.xlu0 %3243
    %v3245 = vsub.f32 %v3027, %v3244
    %v3246 = vsub.f32 %v3029, %v3244
    %v3247 = vsub.f32 %v3109, %v3244
    %v3248 = vmul.f32 %v3245, 1.442695
    %v3249 = vpow.pop %v3248
    %v3250 = vmul.f32 %v3246, 1.442695
    %v3251 = vpow.pop %v3250
    %v3252 = vmul.f32 %v3247, 1.442695
    %v3253 = vpow.pop %v3252
    %v3254 = vadd.f32 %v3249, %v3251
    %v3255 = vadd.f32 %v3254, %v3253
    %3256 = vadd.xlane.f32.xlu0 %v3255
    %v3257 = vpop.xlane.xlu0 %3256
    %v3258 = vlog2.pop %v3257
    %v3259 = vmul.f32 %v3258, 0.6931472
    %v3260 = vsub.f32 %v3245, %v3259
    %v3261 = vsub.f32 %v3246, %v3259
    %v3262 = vsub.f32 %v3247, %v3259
    %3263 = vst [vmem:[#allocation17 + $0x30] sm:$0xff] %v3260
    %3264 = vst [vmem:[#allocation17 + $0x38] sm:$0xff] %v3261
    %3265 = vst [vmem:[#allocation17 + $0x40] sm:$0xff] %v3262
    %3266 = vmax.xlane.f32.xlu0 %v3111
    %v3267 = vpop.xlane.xlu0 %3266
    %v3268 = vsub.f32 %v3111, %v3267
    %v3269 = vmul.f32 %v3268, 1.442695
    %v3270 = vpow.pop %v3269
    %3271 = vadd.xlane.f32.xlu0 %v3270
    %v3272 = vpop.xlane.xlu0 %3271
    %v3273 = vlog2.pop %v3272
    %v3274 = vmul.f32 %v3273, 0.6931472
    %v3275 = vsub.f32 %v3268, %v3274
    %3276 = vst [vmem:[#allocation17 + $0x48] sm:$0xff] %v3275
    %v3277 = vadd.f32 %v3190, %v794
    %3278 = vst [vmem:[#allocation17 + $0x50] sm:$0xff] %v3277
    // Predicated region
    $region74: #{tpu_custom_call.1} parent=1 // pred_check
      _
    $region75: #{tpu_custom_call.1} parent=1 // pred_check_branch
      %3280 = sbr.rel (0) target = $region77
    $region76: #{tpu_custom_call.1} parent=1 // pred_region
      %s3282 = ssub.s32 1408, 1408
      %3283 = vsyncadd [#allocation4], %s3282
      %s3285 = sshll.u32 [#allocation17], 4
      %s3286 = int_to_ptr.vmem [resolvable:$true] %s3285
      %3288 = dma.vmem_to_hbm [thread:$0]  %s3286, 1408, %s9, [#allocation4]
    $region77: #{tpu_custom_call.1} parent=1 // pred_fallthru
      _
    // Predicated region
    $region78: #{tpu_custom_call.1} parent=1 // pred_check
      _
    $region79: #{tpu_custom_call.1} parent=1 // pred_check_branch
      %3290 = sbr.rel (0) target = $region81
    $region80: #{tpu_custom_call.1} parent=1 // pred_region
      %3291 = dma.done [#allocation4], 1408
    $region81: #{tpu_custom_call.1} parent=1 // pred_fallthru
      _
    %3292 = vsyncpa [#allocation3], 1
    %3293 = vsyncpa [#allocation6], 1
    %3294 = vsyncpa [#allocation9], 1
    %3295 = vsyncpa [#allocation12], 1
    %3296 = vsyncpa [#allocation15], 1
    %3297 = vsyncpa [#allocation4], 1

</llo_original>
